<compile_context>
chip_gen: v7x
topology: tpu7x:2x2x1
jax: 0.10.0
libtpu: 0.0.40
codegen_flags: <defaults>
</compile_context>

<pallas_src>
import math
from functools import partial

import jax
import jax.numpy as jnp
import numpy as np
from jax.experimental import pallas as pl
from jax.experimental.pallas import tpu as pltpu

_NEG_SLOPE = 0.01


def _neuralnet_kernel(x_ref, w_ref, b_ref, o_ref):
    """One batch tile of fc1 + leaky_relu.

    x_ref : (TR, PACKED) f32    -- TR*GROUP batch rows, features packed on lanes
    w_ref : (PACKED, GROUP) f32 -- block-diagonal fc1 weights (VMEM-resident)
    b_ref : (1,) f32 in SMEM    -- fc1 bias
    o_ref : (TR, GROUP) f32     -- o[r, j] = leaky_relu(fc1(x[r*GROUP + j]))
    """
    y = jnp.dot(
        x_ref[...], w_ref[...],
        preferred_element_type=jnp.float32,
        precision=jax.lax.Precision.HIGHEST,   # full-precision f32 MXU passes
    ) + b_ref[0]
    # F.leaky_relu(y, 0.01): max(y, slope*y) is exact for slopes in (0, 1).
    o_ref[...] = jnp.maximum(y, _NEG_SLOPE * y).astype(o_ref.dtype)


@partial(jax.jit, static_argnames=("tile_rows",))
def neuralnet_forward(x, weight, bias, *, tile_rows=512):
    """leaky_relu(x @ weight.T + bias, 0.01).

    x: (B, F) f32; weight: (1, F) f32 (PyTorch Linear layout); bias: (1,) f32.
    Returns (B, 1) f32.
    """
    B, F = x.shape
    x = x.astype(jnp.float32)
    w = weight.reshape(F).astype(jnp.float32)
    b = bias.reshape(1).astype(jnp.float32)

    # Pack GROUP batch rows per kernel row so the lane axis is fully dense:
    # GROUP * F is the smallest multiple of 128 (GROUP = 64 for F = 6).
    group = 128 // math.gcd(F, 128)
    packed = group * F

    # Block-diagonal fc1 weights: wbig[g*F + f, j] = w[f] if g == j else 0, so
    # (x_view @ wbig)[r, j] = sum_f x[r*group + j, f] * w[f].
    wbig = jnp.kron(jnp.eye(group, dtype=jnp.float32), w.reshape(F, 1))

    # Pad the batch only to the packing granularity (and to >= 8 view rows so
    # every MXU tile has full sublanes).  For group-aligned large B this is a
    # no-op and the reshape below is a pure reinterpretation -- no extra HBM pass.
    rows = max(pl.cdiv(B, group), 8)
    Bp = rows * group
    if Bp != B:
        x = jnp.pad(x, ((0, Bp - B), (0, 0)))
    x_view = x.reshape(rows, packed)            # row-major: free reinterpretation

    # Tile the view rows.  512 view rows = 32768 batch rows (~768 KiB/input
    # buffer): out of the per-step-overhead regime, tiny vs. VMEM even on v7x.
    # Force >= 2 grid steps when there is enough work so both v7x TCs get fed.
    tr = max(8, (tile_rows // 8) * 8)
    tr = min(tr, rows)
    if tr == rows and rows >= 16:
        tr = (rows // 2) // 8 * 8
    num_tiles = pl.cdiv(rows, tr)               # ragged last tile handled by Pallas

    out = pl.pallas_call(
        _neuralnet_kernel,
        out_shape=jax.ShapeDtypeStruct((rows, group), jnp.float32),
        grid_spec=pl.GridSpec(
            grid=(num_tiles,),
            in_specs=[
                # Natural-layout input tile: one contiguous HBM slab per step.
                pl.BlockSpec((tr, packed), lambda i: (i, 0)),
                # Weights stay resident in VMEM across the whole grid.
                pl.BlockSpec((packed, group), lambda i: (0, 0)),
                # Bias scalar lives in SMEM (no per-step VMEM DMA).
                pl.BlockSpec(memory_space=pltpu.MemorySpace.SMEM),
            ],
            out_specs=pl.BlockSpec((tr, group), lambda i: (i, 0)),
        ),
        compiler_params=pltpu.CompilerParams(
            dimension_semantics=("parallel",),
        ),
        cost_estimate=pl.CostEstimate(
            flops=2 * rows * packed * group,
            transcendentals=0,
            bytes_accessed=4 * (rows * packed + packed * group + rows * group + 1),
        ),
    )(x_view, wbig, b)

    # (rows, group) -> (B, 1): element (r, j) is batch row r*group + j.
    return out.reshape(Bp, 1)[:B]


if __name__ == "__main__":
    key = jax.random.PRNGKey(0)
    k_w, k_b, k_x = jax.random.split(key, 3)

    input_size = 6  # number of columns of `data` in the original script

    # Deterministic parameter init (see TODO at top of file).
    weight = jax.random.normal(k_w, (1, input_size), dtype=jnp.float32) * 0.1
    bias = jax.random.normal(k_b, (1,), dtype=jnp.float32) * 0.1

    def ref_forward(xx):
        # Exact f32 reference (elementwise mul + reduce; no MXU involved).
        y = jnp.sum(xx * weight.reshape(1, -1), axis=1, keepdims=True) + bias
        return jnp.where(y >= 0, y, _NEG_SLOPE * y)

    # 1) `data_tensor` from the spec: data / np.max(data) -> (2, 6).
    data = np.array([[95, 83, 75, 45, 86, 1],
                     [85, 83, 70, 45, 86, 0]], dtype=np.float32)
    x_small = jnp.asarray(data / data.max(), dtype=jnp.float32)
    out_small = jax.block_until_ready(neuralnet_forward(x_small, weight, bias))
    assert out_small.shape == (2, 1)
    # Observed error is ~1e-6; the loose bound only guards a hypothetical
    # reduced-precision MXU fallback.
    assert jnp.max(jnp.abs(out_small - ref_forward(x_small))) < 1e-2

    # 2) Large batch that is NOT a multiple of the packing group (64) or of the
    #    tile: exercises the minimal pad, the multi-step grid, the ragged last
    #    tile and the final slice.
    x_large = jax.random.uniform(k_x, (5000, input_size), dtype=jnp.float32)
    out_large = jax.block_until_ready(neuralnet_forward(x_large, weight, bias))
    assert out_large.shape == (5000, 1)
    assert jnp.max(jnp.abs(out_large - ref_forward(x_large))) < 1e-2

    print("KERNEL_OK")
</pallas_src>

<mosaic_0001>
module attributes {stable_mosaic.version = 11 : i64} {
  func.func @_neuralnet_kernel(%arg0: i32, %arg1: memref<8x384xf32, #tpu.memory_space<vmem>>, %arg2: memref<384x64xf32, #tpu.memory_space<vmem>>, %arg3: memref<1xf32, #tpu.memory_space<smem>>, %arg4: memref<8x64xf32, #tpu.memory_space<vmem>>) attributes {dimension_semantics = [#tpu.dimension_semantics<parallel>], iteration_bounds = array<i64: 1>, scalar_prefetch = 0 : i64, scratch_operands = 0 : i64, tpu.core_type = #tpu.core_type<tc>, window_params = [{transform_indices = @transform_0, window_bounds = array<i64: 8, 384>}, {pipeline_mode = #tpu.pipeline_mode<synchronous>, transform_indices = @transform_1, window_bounds = array<i64: 384, 64>}, {transform_indices = @transform_2, window_bounds = array<i64: 1>}, {transform_indices = @transform_3, window_bounds = array<i64: 8, 64>}]} {
    %c0 = arith.constant 0 : index
    %c0_0 = arith.constant 0 : index
    %0 = vector.load %arg1[%c0, %c0_0] : memref<8x384xf32, #tpu.memory_space<vmem>>, vector<8x384xf32>
    %c0_1 = arith.constant 0 : index
    %c0_2 = arith.constant 0 : index
    %1 = vector.load %arg2[%c0_1, %c0_2] : memref<384x64xf32, #tpu.memory_space<vmem>>, vector<384x64xf32>
    %cst = arith.constant dense<0.000000e+00> : vector<8x64xf32>
    %2 = tpu.matmul %0, %1, %cst {dimension_numbers = #tpu.dot_dimension_numbers<[1], [0], [0], [1], [0, 0, 1, 1], [], []>, precision = #tpu.contract_precision<fp32>} : vector<8x384xf32>, vector<384x64xf32>, vector<8x64xf32> -> vector<8x64xf32>
    %c0_3 = arith.constant 0 : index
    %3 = memref.load %arg3[%c0_3] : memref<1xf32, #tpu.memory_space<smem>>
    %4 = vector.broadcast %3 : f32 to vector<8x64xf32>
    %5 = arith.addf %2, %4 : vector<8x64xf32>
    %cst_4 = arith.constant 0.00999999977 : f32
    %6 = vector.broadcast %cst_4 : f32 to vector<8x64xf32>
    %7 = arith.mulf %6, %5 : vector<8x64xf32>
    %8 = arith.maximumf %5, %7 : vector<8x64xf32>
    %c0_5 = arith.constant 0 : index
    %c0_6 = arith.constant 0 : index
    %9 = vector.load %arg4[%c0_5, %c0_6] : memref<8x64xf32, #tpu.memory_space<vmem>>, vector<8x64xf32>
    tpu.vector_store %arg4[%c0_5, %c0_6], %8 {strides = array<i32>} : memref<8x64xf32, #tpu.memory_space<vmem>>, vector<8x64xf32>,
    return
  }
  func.func @transform_0(%arg0: i32) -> (i32, i32) {
    %c0_i32 = arith.constant 0 : i32
    %c0_i32_0 = arith.constant 0 : i32
    return %arg0, %c0_i32 : i32, i32
  }
  func.func @transform_1(%arg0: i32) -> (i32, i32) {
    %c0_i32 = arith.constant 0 : i32
    %c0_i32_0 = arith.constant 0 : i32
    %c0_i32_1 = arith.constant 0 : i32
    return %c0_i32, %c0_i32_0 : i32, i32
  }
  func.func @transform_2(%arg0: i32) -> i32 {
    %c0_i32 = arith.constant 0 : i32
    %c0_i32_0 = arith.constant 0 : i32
    return %c0_i32 : i32
  }
  func.func @transform_3(%arg0: i32) -> (i32, i32) {
    %c0_i32 = arith.constant 0 : i32
    %c0_i32_0 = arith.constant 0 : i32
    return %arg0, %c0_i32 : i32, i32
  }
}

</mosaic_0001>

<llo_original>
// kernel: neuralnet_forward.1
$region0: #{neuralnet_forward.1}
  #allocation0 [shape = 'u32[]', space=smem, size = 0x4, offset = 0x4, fixed_abs, tag = 'smem constant byte address 0x4 - core index']
  #allocation1 [shape = 'u32[144,128]{1,0:T(1,128)}', space=vmem, size = 0x12000, scoped, tag = 'internal scratch']
  #allocation2 [shape = 'f32[1]{0:T(128)S(6)}', space=smem, size = 0x200, scoped, tag = 'scoped memory for neuralnet_forward.1']
  %s0 = inlined_call_operand.vmem [shape: f32[8,384], index: 0, kind: input, shape index: {}]
  %s1 = inlined_call_operand.vmem [shape: f32[384,64], index: 1, kind: input, shape index: {}]
  %s2 = inlined_call_operand.<no memory space> [shape: f32[1], index: 2, kind: input, shape index: {}]
  %s3 = inlined_call_operand.vmem [shape: f32[8,64], index: 3, kind: output, shape index: {}]
  %s4 = sld [smem:[#allocation0]]
  $region22: #{neuralnet_forward.1} parent=0
    _
  %s6 = ssub.s32 1, %s4
  %s7 = scalar_select 0, %s6, %s4
  %8 = sst [smem:[#allocation2]] %s2
  // Predicated region
  $region2: #{neuralnet_forward.1} parent=0 // pred_check
    _
  $region3: #{neuralnet_forward.1} parent=0 // pred_check_branch
    %10 = sbr.rel (0) target = $region5
  $region4: #{neuralnet_forward.1} parent=0 // pred_region
    _
  $region5: #{neuralnet_forward.1} parent=0 // pred_fallthru
    _
  // Predicated region
  $region6: #{neuralnet_forward.1} parent=0 // pred_check
    _
  $region7: #{neuralnet_forward.1} parent=0 // pred_check_branch
    %12 = sbr.rel (0) target = $region9
  $region8: #{neuralnet_forward.1} parent=0 // pred_region
    _
  $region9: #{neuralnet_forward.1} parent=0 // pred_fallthru
    _
  // Predicated region
  $region10: #{neuralnet_forward.1} parent=0 // pred_check
    _
  $region11: #{neuralnet_forward.1} parent=0 // pred_check_branch
    %14 = sbr.rel (0) target = $region13
  $region12: #{neuralnet_forward.1} parent=0 // pred_region
    _
  $region13: #{neuralnet_forward.1} parent=0 // pred_fallthru
    _
  %v15 = vld [vmem:[%s0] sm:$0xff]
  %v16 = vld [vmem:[%s0 + $0x8] sm:$0xff]
  %v17 = vld [vmem:[%s0 + $0x10] sm:$0xff]
  %v18 = vld [vmem:[%s1] sm:$0xff]
  %v19 = vld [vmem:[%s1 + $0x8] sm:$0xff]
  %v20 = vld [vmem:[%s1 + $0x10] sm:$0xff]
  %v21 = vld [vmem:[%s1 + $0x18] sm:$0xff]
  %v22 = vld [vmem:[%s1 + $0x20] sm:$0xff]
  %v23 = vld [vmem:[%s1 + $0x28] sm:$0xff]
  %v24 = vld [vmem:[%s1 + $0x30] sm:$0xff]
  %v25 = vld [vmem:[%s1 + $0x38] sm:$0xff]
  %v26 = vld [vmem:[%s1 + $0x40] sm:$0xff]
  %v27 = vld [vmem:[%s1 + $0x48] sm:$0xff]
  %v28 = vld [vmem:[%s1 + $0x50] sm:$0xff]
  %v29 = vld [vmem:[%s1 + $0x58] sm:$0xff]
  %v30 = vld [vmem:[%s1 + $0x60] sm:$0xff]
  %v31 = vld [vmem:[%s1 + $0x68] sm:$0xff]
  %v32 = vld [vmem:[%s1 + $0x70] sm:$0xff]
  %v33 = vld [vmem:[%s1 + $0x78] sm:$0xff]
  %v34 = vld [vmem:[%s1 + $0x80] sm:$0xff]
  %v35 = vld [vmem:[%s1 + $0x88] sm:$0xff]
  %v36 = vld [vmem:[%s1 + $0x90] sm:$0xff]
  %v37 = vld [vmem:[%s1 + $0x98] sm:$0xff]
  %v38 = vld [vmem:[%s1 + $0xa0] sm:$0xff]
  %v39 = vld [vmem:[%s1 + $0xa8] sm:$0xff]
  %v40 = vld [vmem:[%s1 + $0xb0] sm:$0xff]
  %v41 = vld [vmem:[%s1 + $0xb8] sm:$0xff]
  %v42 = vld [vmem:[%s1 + $0xc0] sm:$0xff]
  %v43 = vld [vmem:[%s1 + $0xc8] sm:$0xff]
  %v44 = vld [vmem:[%s1 + $0xd0] sm:$0xff]
  %v45 = vld [vmem:[%s1 + $0xd8] sm:$0xff]
  %v46 = vld [vmem:[%s1 + $0xe0] sm:$0xff]
  %v47 = vld [vmem:[%s1 + $0xe8] sm:$0xff]
  %v48 = vld [vmem:[%s1 + $0xf0] sm:$0xff]
  %v49 = vld [vmem:[%s1 + $0xf8] sm:$0xff]
  %v50 = vld [vmem:[%s1 + $0x100] sm:$0xff]
  %v51 = vld [vmem:[%s1 + $0x108] sm:$0xff]
  %v52 = vld [vmem:[%s1 + $0x110] sm:$0xff]
  %v53 = vld [vmem:[%s1 + $0x118] sm:$0xff]
  %v54 = vld [vmem:[%s1 + $0x120] sm:$0xff]
  %v55 = vld [vmem:[%s1 + $0x128] sm:$0xff]
  %v56 = vld [vmem:[%s1 + $0x130] sm:$0xff]
  %v57 = vld [vmem:[%s1 + $0x138] sm:$0xff]
  %v58 = vld [vmem:[%s1 + $0x140] sm:$0xff]
  %v59 = vld [vmem:[%s1 + $0x148] sm:$0xff]
  %v60 = vld [vmem:[%s1 + $0x150] sm:$0xff]
  %v61 = vld [vmem:[%s1 + $0x158] sm:$0xff]
  %v62 = vld [vmem:[%s1 + $0x160] sm:$0xff]
  %v63 = vld [vmem:[%s1 + $0x168] sm:$0xff]
  %v64 = vld [vmem:[%s1 + $0x170] sm:$0xff]
  %v65 = vld [vmem:[%s1 + $0x178] sm:$0xff]
  %s66 = sld [smem:[#allocation2]]
  %v67 = vstv %s66
  %68 = vmatprep.subr.mxu0 0.0
  %v69 = vand.u32 %v18, 4294901760
  %70 = vmatpush1.msra.mxu0 %v69
  %71 = vmatprep.subr.mxu0 0.0
  %v72 = vand.u32 %v19, 4294901760
  %73 = vmatpush1.msra.mxu0 %v72
  %74 = vmatprep.subr.mxu0 0.0
  %v75 = vand.u32 %v20, 4294901760
  %76 = vmatpush1.msra.mxu0 %v75
  %77 = vmatprep.subr.mxu0 0.0
  %v78 = vand.u32 %v21, 4294901760
  %79 = vmatpush1.msra.mxu0 %v78
  %80 = vmatprep.subr.mxu0 0.0
  %v81 = vand.u32 %v22, 4294901760
  %82 = vmatpush1.msra.mxu0 %v81
  %83 = vmatprep.subr.mxu0 0.0
  %v84 = vand.u32 %v23, 4294901760
  %85 = vmatpush1.msra.mxu0 %v84
  %86 = vmatprep.subr.mxu0 0.0
  %v87 = vand.u32 %v24, 4294901760
  %88 = vmatpush1.msra.mxu0 %v87
  %89 = vmatprep.subr.mxu0 0.0
  %v90 = vand.u32 %v25, 4294901760
  %91 = vmatpush1.msra.mxu0 %v90
  %92 = vmatprep.subr.mxu0 0.0
  %v93 = vand.u32 %v26, 4294901760
  %94 = vmatpush1.msra.mxu0 %v93
  %95 = vmatprep.subr.mxu0 0.0
  %v96 = vand.u32 %v27, 4294901760
  %97 = vmatpush1.msra.mxu0 %v96
  %98 = vmatprep.subr.mxu0 0.0
  %v99 = vand.u32 %v28, 4294901760
  %100 = vmatpush1.msra.mxu0 %v99
  %101 = vmatprep.subr.mxu0 0.0
  %v102 = vand.u32 %v29, 4294901760
  %103 = vmatpush1.msra.mxu0 %v102
  %104 = vmatprep.subr.mxu0 0.0
  %v105 = vand.u32 %v30, 4294901760
  %106 = vmatpush1.msra.mxu0 %v105
  %107 = vmatprep.subr.mxu0 0.0
  %v108 = vand.u32 %v31, 4294901760
  %109 = vmatpush1.msra.mxu0 %v108
  %110 = vmatprep.subr.mxu0 0.0
  %v111 = vand.u32 %v32, 4294901760
  %112 = vmatpush1.msra.mxu0 %v111
  %113 = vmatprep.subr.mxu0 0.0
  %v114 = vand.u32 %v33, 4294901760
  %115 = vmatpush1.msra.mxu0 %v114
  %116 = vmatprep.subr.mxu0 0.0
  %v117 = vand.u32 %v34, 4294901760
  %118 = vmatpush1.msra.mxu0 %v117
  %119 = vmatprep.subr.mxu0 0.0
  %v120 = vand.u32 %v35, 4294901760
  %121 = vmatpush1.msra.mxu0 %v120
  %122 = vmatprep.subr.mxu0 0.0
  %v123 = vand.u32 %v36, 4294901760
  %124 = vmatpush1.msra.mxu0 %v123
  %125 = vmatprep.subr.mxu0 0.0
  %v126 = vand.u32 %v37, 4294901760
  %127 = vmatpush1.msra.mxu0 %v126
  %128 = vmatprep.subr.mxu0 0.0
  %v129 = vand.u32 %v38, 4294901760
  %130 = vmatpush1.msra.mxu0 %v129
  %131 = vmatprep.subr.mxu0 0.0
  %v132 = vand.u32 %v39, 4294901760
  %133 = vmatpush1.msra.mxu0 %v132
  %134 = vmatprep.subr.mxu0 0.0
  %v135 = vand.u32 %v40, 4294901760
  %136 = vmatpush1.msra.mxu0 %v135
  %137 = vmatprep.subr.mxu0 0.0
  %v138 = vand.u32 %v41, 4294901760
  %139 = vmatpush1.msra.mxu0 %v138
  %140 = vmatprep.subr.mxu0 0.0
  %v141 = vand.u32 %v42, 4294901760
  %142 = vmatpush1.msra.mxu0 %v141
  %143 = vmatprep.subr.mxu0 0.0
  %v144 = vand.u32 %v43, 4294901760
  %145 = vmatpush1.msra.mxu0 %v144
  %146 = vmatprep.subr.mxu0 0.0
  %v147 = vand.u32 %v44, 4294901760
  %148 = vmatpush1.msra.mxu0 %v147
  %149 = vmatprep.subr.mxu0 0.0
  %v150 = vand.u32 %v45, 4294901760
  %151 = vmatpush1.msra.mxu0 %v150
  %152 = vmatprep.subr.mxu0 0.0
  %v153 = vand.u32 %v46, 4294901760
  %154 = vmatpush1.msra.mxu0 %v153
  %155 = vmatprep.subr.mxu0 0.0
  %v156 = vand.u32 %v47, 4294901760
  %157 = vmatpush1.msra.mxu0 %v156
  %158 = vmatprep.subr.mxu0 0.0
  %v159 = vand.u32 %v48, 4294901760
  %160 = vmatpush1.msra.mxu0 %v159
  %161 = vmatprep.subr.mxu0 0.0
  %v162 = vand.u32 %v49, 4294901760
  %163 = vmatpush1.msra.mxu0 %v162
  %v164 = vand.u32 %v16, 4294901760
  %v165 = vsub.f32 %v16, %v164
  %v166 = vand.u32 %v165, 4294901760
  %v167 = vsub.f32 %v165, %v166
  %v168 = vand.u32 %v167, 4294901760
  %169 = vmatprep.mubr.f32.mxu0 %v168
  %v170 = vand.u32 %v15, 4294901760
  %v171 = vsub.f32 %v15, %v170
  %v172 = vand.u32 %v171, 4294901760
  %v173 = vsub.f32 %v171, %v172
  %v174 = vand.u32 %v173, 4294901760
  %175 = vmatmul.mubr.f32.gmra.mrb[0].mxu0 %v174
  %v176 = vpop.f32.mrb[0].mxu0
  %v177 = vadd.f32 %v67, %v176
  %v178 = vpop.f32.mrb[0].mxu0
  %179 = vdwg.mxu0
  %180 = vmatprep.subr.mxu0 0.0
  %v181 = vand.u32 %v18, 4294901760
  %v182 = vsub.f32 %v18, %v181
  %v183 = vand.u32 %v182, 4294901760
  %v184 = vsub.f32 %v182, %v183
  %v185 = vand.u32 %v184, 4294901760
  %186 = vmatpush1.msra.mxu0 %v185
  %187 = vmatprep.subr.mxu0 0.0
  %v188 = vand.u32 %v19, 4294901760
  %v189 = vsub.f32 %v19, %v188
  %v190 = vand.u32 %v189, 4294901760
  %v191 = vsub.f32 %v189, %v190
  %v192 = vand.u32 %v191, 4294901760
  %193 = vmatpush1.msra.mxu0 %v192
  %194 = vmatprep.subr.mxu0 0.0
  %v195 = vand.u32 %v20, 4294901760
  %v196 = vsub.f32 %v20, %v195
  %v197 = vand.u32 %v196, 4294901760
  %v198 = vsub.f32 %v196, %v197
  %v199 = vand.u32 %v198, 4294901760
  %200 = vmatpush1.msra.mxu0 %v199
  %201 = vmatprep.subr.mxu0 0.0
  %v202 = vand.u32 %v21, 4294901760
  %v203 = vsub.f32 %v21, %v202
  %v204 = vand.u32 %v203, 4294901760
  %v205 = vsub.f32 %v203, %v204
  %v206 = vand.u32 %v205, 4294901760
  %207 = vmatpush1.msra.mxu0 %v206
  %208 = vmatprep.subr.mxu0 0.0
  %v209 = vand.u32 %v22, 4294901760
  %v210 = vsub.f32 %v22, %v209
  %v211 = vand.u32 %v210, 4294901760
  %v212 = vsub.f32 %v210, %v211
  %v213 = vand.u32 %v212, 4294901760
  %214 = vmatpush1.msra.mxu0 %v213
  %215 = vmatprep.subr.mxu0 0.0
  %v216 = vand.u32 %v23, 4294901760
  %v217 = vsub.f32 %v23, %v216
  %v218 = vand.u32 %v217, 4294901760
  %v219 = vsub.f32 %v217, %v218
  %v220 = vand.u32 %v219, 4294901760
  %221 = vmatpush1.msra.mxu0 %v220
  %222 = vmatprep.subr.mxu0 0.0
  %v223 = vand.u32 %v24, 4294901760
  %v224 = vsub.f32 %v24, %v223
  %v225 = vand.u32 %v224, 4294901760
  %v226 = vsub.f32 %v224, %v225
  %v227 = vand.u32 %v226, 4294901760
  %228 = vmatpush1.msra.mxu0 %v227
  %229 = vmatprep.subr.mxu0 0.0
  %v230 = vand.u32 %v25, 4294901760
  %v231 = vsub.f32 %v25, %v230
  %v232 = vand.u32 %v231, 4294901760
  %v233 = vsub.f32 %v231, %v232
  %v234 = vand.u32 %v233, 4294901760
  %235 = vmatpush1.msra.mxu0 %v234
  %236 = vmatprep.subr.mxu0 0.0
  %v237 = vand.u32 %v26, 4294901760
  %v238 = vsub.f32 %v26, %v237
  %v239 = vand.u32 %v238, 4294901760
  %v240 = vsub.f32 %v238, %v239
  %v241 = vand.u32 %v240, 4294901760
  %242 = vmatpush1.msra.mxu0 %v241
  %243 = vmatprep.subr.mxu0 0.0
  %v244 = vand.u32 %v27, 4294901760
  %v245 = vsub.f32 %v27, %v244
  %v246 = vand.u32 %v245, 4294901760
  %v247 = vsub.f32 %v245, %v246
  %v248 = vand.u32 %v247, 4294901760
  %249 = vmatpush1.msra.mxu0 %v248
  %250 = vmatprep.subr.mxu0 0.0
  %v251 = vand.u32 %v28, 4294901760
  %v252 = vsub.f32 %v28, %v251
  %v253 = vand.u32 %v252, 4294901760
  %v254 = vsub.f32 %v252, %v253
  %v255 = vand.u32 %v254, 4294901760
  %256 = vmatpush1.msra.mxu0 %v255
  %257 = vmatprep.subr.mxu0 0.0
  %v258 = vand.u32 %v29, 4294901760
  %v259 = vsub.f32 %v29, %v258
  %v260 = vand.u32 %v259, 4294901760
  %v261 = vsub.f32 %v259, %v260
  %v262 = vand.u32 %v261, 4294901760
  %263 = vmatpush1.msra.mxu0 %v262
  %264 = vmatprep.subr.mxu0 0.0
  %v265 = vand.u32 %v30, 4294901760
  %v266 = vsub.f32 %v30, %v265
  %v267 = vand.u32 %v266, 4294901760
  %v268 = vsub.f32 %v266, %v267
  %v269 = vand.u32 %v268, 4294901760
  %270 = vmatpush1.msra.mxu0 %v269
  %271 = vmatprep.subr.mxu0 0.0
  %v272 = vand.u32 %v31, 4294901760
  %v273 = vsub.f32 %v31, %v272
  %v274 = vand.u32 %v273, 4294901760
  %v275 = vsub.f32 %v273, %v274
  %v276 = vand.u32 %v275, 4294901760
  %277 = vmatpush1.msra.mxu0 %v276
  %278 = vmatprep.subr.mxu0 0.0
  %v279 = vand.u32 %v32, 4294901760
  %v280 = vsub.f32 %v32, %v279
  %v281 = vand.u32 %v280, 4294901760
  %v282 = vsub.f32 %v280, %v281
  %v283 = vand.u32 %v282, 4294901760
  %284 = vmatpush1.msra.mxu0 %v283
  %285 = vmatprep.subr.mxu0 0.0
  %v286 = vand.u32 %v33, 4294901760
  %v287 = vsub.f32 %v33, %v286
  %v288 = vand.u32 %v287, 4294901760
  %v289 = vsub.f32 %v287, %v288
  %v290 = vand.u32 %v289, 4294901760
  %291 = vmatpush1.msra.mxu0 %v290
  %292 = vmatprep.subr.mxu0 0.0
  %v293 = vand.u32 %v34, 4294901760
  %v294 = vsub.f32 %v34, %v293
  %v295 = vand.u32 %v294, 4294901760
  %v296 = vsub.f32 %v294, %v295
  %v297 = vand.u32 %v296, 4294901760
  %298 = vmatpush1.msra.mxu0 %v297
  %299 = vmatprep.subr.mxu0 0.0
  %v300 = vand.u32 %v35, 4294901760
  %v301 = vsub.f32 %v35, %v300
  %v302 = vand.u32 %v301, 4294901760
  %v303 = vsub.f32 %v301, %v302
  %v304 = vand.u32 %v303, 4294901760
  %305 = vmatpush1.msra.mxu0 %v304
  %306 = vmatprep.subr.mxu0 0.0
  %v307 = vand.u32 %v36, 4294901760
  %v308 = vsub.f32 %v36, %v307
  %v309 = vand.u32 %v308, 4294901760
  %v310 = vsub.f32 %v308, %v309
  %v311 = vand.u32 %v310, 4294901760
  %312 = vmatpush1.msra.mxu0 %v311
  %313 = vmatprep.subr.mxu0 0.0
  %v314 = vand.u32 %v37, 4294901760
  %v315 = vsub.f32 %v37, %v314
  %v316 = vand.u32 %v315, 4294901760
  %v317 = vsub.f32 %v315, %v316
  %v318 = vand.u32 %v317, 4294901760
  %319 = vmatpush1.msra.mxu0 %v318
  %320 = vmatprep.subr.mxu0 0.0
  %v321 = vand.u32 %v38, 4294901760
  %v322 = vsub.f32 %v38, %v321
  %v323 = vand.u32 %v322, 4294901760
  %v324 = vsub.f32 %v322, %v323
  %v325 = vand.u32 %v324, 4294901760
  %326 = vmatpush1.msra.mxu0 %v325
  %327 = vmatprep.subr.mxu0 0.0
  %v328 = vand.u32 %v39, 4294901760
  %v329 = vsub.f32 %v39, %v328
  %v330 = vand.u32 %v329, 4294901760
  %v331 = vsub.f32 %v329, %v330
  %v332 = vand.u32 %v331, 4294901760
  %333 = vmatpush1.msra.mxu0 %v332
  %334 = vmatprep.subr.mxu0 0.0
  %v335 = vand.u32 %v40, 4294901760
  %v336 = vsub.f32 %v40, %v335
  %v337 = vand.u32 %v336, 4294901760
  %v338 = vsub.f32 %v336, %v337
  %v339 = vand.u32 %v338, 4294901760
  %340 = vmatpush1.msra.mxu0 %v339
  %341 = vmatprep.subr.mxu0 0.0
  %v342 = vand.u32 %v41, 4294901760
  %v343 = vsub.f32 %v41, %v342
  %v344 = vand.u32 %v343, 4294901760
  %v345 = vsub.f32 %v343, %v344
  %v346 = vand.u32 %v345, 4294901760
  %347 = vmatpush1.msra.mxu0 %v346
  %348 = vmatprep.subr.mxu0 0.0
  %v349 = vand.u32 %v42, 4294901760
  %v350 = vsub.f32 %v42, %v349
  %v351 = vand.u32 %v350, 4294901760
  %v352 = vsub.f32 %v350, %v351
  %v353 = vand.u32 %v352, 4294901760
  %354 = vmatpush1.msra.mxu0 %v353
  %355 = vmatprep.subr.mxu0 0.0
  %v356 = vand.u32 %v43, 4294901760
  %v357 = vsub.f32 %v43, %v356
  %v358 = vand.u32 %v357, 4294901760
  %v359 = vsub.f32 %v357, %v358
  %v360 = vand.u32 %v359, 4294901760
  %361 = vmatpush1.msra.mxu0 %v360
  %362 = vmatprep.subr.mxu0 0.0
  %v363 = vand.u32 %v44, 4294901760
  %v364 = vsub.f32 %v44, %v363
  %v365 = vand.u32 %v364, 4294901760
  %v366 = vsub.f32 %v364, %v365
  %v367 = vand.u32 %v366, 4294901760
  %368 = vmatpush1.msra.mxu0 %v367
  %369 = vmatprep.subr.mxu0 0.0
  %v370 = vand.u32 %v45, 4294901760
  %v371 = vsub.f32 %v45, %v370
  %v372 = vand.u32 %v371, 4294901760
  %v373 = vsub.f32 %v371, %v372
  %v374 = vand.u32 %v373, 4294901760
  %375 = vmatpush1.msra.mxu0 %v374
  %376 = vmatprep.subr.mxu0 0.0
  %v377 = vand.u32 %v46, 4294901760
  %v378 = vsub.f32 %v46, %v377
  %v379 = vand.u32 %v378, 4294901760
  %v380 = vsub.f32 %v378, %v379
  %v381 = vand.u32 %v380, 4294901760
  %382 = vmatpush1.msra.mxu0 %v381
  %383 = vmatprep.subr.mxu0 0.0
  %v384 = vand.u32 %v47, 4294901760
  %v385 = vsub.f32 %v47, %v384
  %v386 = vand.u32 %v385, 4294901760
  %v387 = vsub.f32 %v385, %v386
  %v388 = vand.u32 %v387, 4294901760
  %389 = vmatpush1.msra.mxu0 %v388
  %390 = vmatprep.subr.mxu0 0.0
  %v391 = vand.u32 %v48, 4294901760
  %v392 = vsub.f32 %v48, %v391
  %v393 = vand.u32 %v392, 4294901760
  %v394 = vsub.f32 %v392, %v393
  %v395 = vand.u32 %v394, 4294901760
  %396 = vmatpush1.msra.mxu0 %v395
  %397 = vmatprep.subr.mxu0 0.0
  %v398 = vand.u32 %v49, 4294901760
  %v399 = vsub.f32 %v49, %v398
  %v400 = vand.u32 %v399, 4294901760
  %v401 = vsub.f32 %v399, %v400
  %v402 = vand.u32 %v401, 4294901760
  %403 = vmatpush1.msra.mxu0 %v402
  %v404 = vand.u32 %v16, 4294901760
  %405 = vmatprep.mubr.f32.mxu0 %v404
  %v406 = vand.u32 %v15, 4294901760
  %407 = vmatmul.mubr.f32.gmra.mrb[0].mxu0 %v406
  %v408 = vpop.f32.mrb[0].mxu0
  %v409 = vadd.f32 %v177, %v408
  %v410 = vpop.f32.mrb[0].mxu0
  %411 = vdwg.mxu0
  %412 = vmatprep.subr.mxu0 0.0
  %v413 = vand.u32 %v18, 4294901760
  %v414 = vsub.f32 %v18, %v413
  %415 = vmatpush1.msra.mxu0 %v414
  %416 = vmatprep.subr.mxu0 0.0
  %v417 = vand.u32 %v19, 4294901760
  %v418 = vsub.f32 %v19, %v417
  %419 = vmatpush1.msra.mxu0 %v418
  %420 = vmatprep.subr.mxu0 0.0
  %v421 = vand.u32 %v20, 4294901760
  %v422 = vsub.f32 %v20, %v421
  %423 = vmatpush1.msra.mxu0 %v422
  %424 = vmatprep.subr.mxu0 0.0
  %v425 = vand.u32 %v21, 4294901760
  %v426 = vsub.f32 %v21, %v425
  %427 = vmatpush1.msra.mxu0 %v426
  %428 = vmatprep.subr.mxu0 0.0
  %v429 = vand.u32 %v22, 4294901760
  %v430 = vsub.f32 %v22, %v429
  %431 = vmatpush1.msra.mxu0 %v430
  %432 = vmatprep.subr.mxu0 0.0
  %v433 = vand.u32 %v23, 4294901760
  %v434 = vsub.f32 %v23, %v433
  %435 = vmatpush1.msra.mxu0 %v434
  %436 = vmatprep.subr.mxu0 0.0
  %v437 = vand.u32 %v24, 4294901760
  %v438 = vsub.f32 %v24, %v437
  %439 = vmatpush1.msra.mxu0 %v438
  %440 = vmatprep.subr.mxu0 0.0
  %v441 = vand.u32 %v25, 4294901760
  %v442 = vsub.f32 %v25, %v441
  %443 = vmatpush1.msra.mxu0 %v442
  %444 = vmatprep.subr.mxu0 0.0
  %v445 = vand.u32 %v26, 4294901760
  %v446 = vsub.f32 %v26, %v445
  %447 = vmatpush1.msra.mxu0 %v446
  %448 = vmatprep.subr.mxu0 0.0
  %v449 = vand.u32 %v27, 4294901760
  %v450 = vsub.f32 %v27, %v449
  %451 = vmatpush1.msra.mxu0 %v450
  %452 = vmatprep.subr.mxu0 0.0
  %v453 = vand.u32 %v28, 4294901760
  %v454 = vsub.f32 %v28, %v453
  %455 = vmatpush1.msra.mxu0 %v454
  %456 = vmatprep.subr.mxu0 0.0
  %v457 = vand.u32 %v29, 4294901760
  %v458 = vsub.f32 %v29, %v457
  %459 = vmatpush1.msra.mxu0 %v458
  %460 = vmatprep.subr.mxu0 0.0
  %v461 = vand.u32 %v30, 4294901760
  %v462 = vsub.f32 %v30, %v461
  %463 = vmatpush1.msra.mxu0 %v462
  %464 = vmatprep.subr.mxu0 0.0
  %v465 = vand.u32 %v31, 4294901760
  %v466 = vsub.f32 %v31, %v465
  %467 = vmatpush1.msra.mxu0 %v466
  %468 = vmatprep.subr.mxu0 0.0
  %v469 = vand.u32 %v32, 4294901760
  %v470 = vsub.f32 %v32, %v469
  %471 = vmatpush1.msra.mxu0 %v470
  %472 = vmatprep.subr.mxu0 0.0
  %v473 = vand.u32 %v33, 4294901760
  %v474 = vsub.f32 %v33, %v473
  %475 = vmatpush1.msra.mxu0 %v474
  %476 = vmatprep.subr.mxu0 0.0
  %v477 = vand.u32 %v34, 4294901760
  %v478 = vsub.f32 %v34, %v477
  %479 = vmatpush1.msra.mxu0 %v478
  %480 = vmatprep.subr.mxu0 0.0
  %v481 = vand.u32 %v35, 4294901760
  %v482 = vsub.f32 %v35, %v481
  %483 = vmatpush1.msra.mxu0 %v482
  %484 = vmatprep.subr.mxu0 0.0
  %v485 = vand.u32 %v36, 4294901760
  %v486 = vsub.f32 %v36, %v485
  %487 = vmatpush1.msra.mxu0 %v486
  %488 = vmatprep.subr.mxu0 0.0
  %v489 = vand.u32 %v37, 4294901760
  %v490 = vsub.f32 %v37, %v489
  %491 = vmatpush1.msra.mxu0 %v490
  %492 = vmatprep.subr.mxu0 0.0
  %v493 = vand.u32 %v38, 4294901760
  %v494 = vsub.f32 %v38, %v493
  %495 = vmatpush1.msra.mxu0 %v494
  %496 = vmatprep.subr.mxu0 0.0
  %v497 = vand.u32 %v39, 4294901760
  %v498 = vsub.f32 %v39, %v497
  %499 = vmatpush1.msra.mxu0 %v498
  %500 = vmatprep.subr.mxu0 0.0
  %v501 = vand.u32 %v40, 4294901760
  %v502 = vsub.f32 %v40, %v501
  %503 = vmatpush1.msra.mxu0 %v502
  %504 = vmatprep.subr.mxu0 0.0
  %v505 = vand.u32 %v41, 4294901760
  %v506 = vsub.f32 %v41, %v505
  %507 = vmatpush1.msra.mxu0 %v506
  %508 = vmatprep.subr.mxu0 0.0
  %v509 = vand.u32 %v42, 4294901760
  %v510 = vsub.f32 %v42, %v509
  %511 = vmatpush1.msra.mxu0 %v510
  %512 = vmatprep.subr.mxu0 0.0
  %v513 = vand.u32 %v43, 4294901760
  %v514 = vsub.f32 %v43, %v513
  %515 = vmatpush1.msra.mxu0 %v514
  %516 = vmatprep.subr.mxu0 0.0
  %v517 = vand.u32 %v44, 4294901760
  %v518 = vsub.f32 %v44, %v517
  %519 = vmatpush1.msra.mxu0 %v518
  %520 = vmatprep.subr.mxu0 0.0
  %v521 = vand.u32 %v45, 4294901760
  %v522 = vsub.f32 %v45, %v521
  %523 = vmatpush1.msra.mxu0 %v522
  %524 = vmatprep.subr.mxu0 0.0
  %v525 = vand.u32 %v46, 4294901760
  %v526 = vsub.f32 %v46, %v525
  %527 = vmatpush1.msra.mxu0 %v526
  %528 = vmatprep.subr.mxu0 0.0
  %v529 = vand.u32 %v47, 4294901760
  %v530 = vsub.f32 %v47, %v529
  %531 = vmatpush1.msra.mxu0 %v530
  %532 = vmatprep.subr.mxu0 0.0
  %v533 = vand.u32 %v48, 4294901760
  %v534 = vsub.f32 %v48, %v533
  %535 = vmatpush1.msra.mxu0 %v534
  %536 = vmatprep.subr.mxu0 0.0
  %v537 = vand.u32 %v49, 4294901760
  %v538 = vsub.f32 %v49, %v537
  %539 = vmatpush1.msra.mxu0 %v538
  %v540 = vand.u32 %v16, 4294901760
  %v541 = vsub.f32 %v16, %v540
  %542 = vmatprep.mubr.f32.mxu0 %v541
  %v543 = vand.u32 %v15, 4294901760
  %v544 = vsub.f32 %v15, %v543
  %545 = vmatmul.mubr.f32.gmra.mrb[0].mxu0 %v544
  %v546 = vpop.f32.mrb[0].mxu0
  %v547 = vadd.f32 %v409, %v546
  %v548 = vpop.f32.mrb[0].mxu0
  %549 = vdwg.mxu0
  %550 = vmatprep.subr.mxu0 0.0
  %v551 = vand.u32 %v18, 4294901760
  %552 = vmatpush1.msra.mxu0 %v551
  %553 = vmatprep.subr.mxu0 0.0
  %v554 = vand.u32 %v19, 4294901760
  %555 = vmatpush1.msra.mxu0 %v554
  %556 = vmatprep.subr.mxu0 0.0
  %v557 = vand.u32 %v20, 4294901760
  %558 = vmatpush1.msra.mxu0 %v557
  %559 = vmatprep.subr.mxu0 0.0
  %v560 = vand.u32 %v21, 4294901760
  %561 = vmatpush1.msra.mxu0 %v560
  %562 = vmatprep.subr.mxu0 0.0
  %v563 = vand.u32 %v22, 4294901760
  %564 = vmatpush1.msra.mxu0 %v563
  %565 = vmatprep.subr.mxu0 0.0
  %v566 = vand.u32 %v23, 4294901760
  %567 = vmatpush1.msra.mxu0 %v566
  %568 = vmatprep.subr.mxu0 0.0
  %v569 = vand.u32 %v24, 4294901760
  %570 = vmatpush1.msra.mxu0 %v569
  %571 = vmatprep.subr.mxu0 0.0
  %v572 = vand.u32 %v25, 4294901760
  %573 = vmatpush1.msra.mxu0 %v572
  %574 = vmatprep.subr.mxu0 0.0
  %v575 = vand.u32 %v26, 4294901760
  %576 = vmatpush1.msra.mxu0 %v575
  %577 = vmatprep.subr.mxu0 0.0
  %v578 = vand.u32 %v27, 4294901760
  %579 = vmatpush1.msra.mxu0 %v578
  %580 = vmatprep.subr.mxu0 0.0
  %v581 = vand.u32 %v28, 4294901760
  %582 = vmatpush1.msra.mxu0 %v581
  %583 = vmatprep.subr.mxu0 0.0
  %v584 = vand.u32 %v29, 4294901760
  %585 = vmatpush1.msra.mxu0 %v584
  %586 = vmatprep.subr.mxu0 0.0
  %v587 = vand.u32 %v30, 4294901760
  %588 = vmatpush1.msra.mxu0 %v587
  %589 = vmatprep.subr.mxu0 0.0
  %v590 = vand.u32 %v31, 4294901760
  %591 = vmatpush1.msra.mxu0 %v590
  %592 = vmatprep.subr.mxu0 0.0
  %v593 = vand.u32 %v32, 4294901760
  %594 = vmatpush1.msra.mxu0 %v593
  %595 = vmatprep.subr.mxu0 0.0
  %v596 = vand.u32 %v33, 4294901760
  %597 = vmatpush1.msra.mxu0 %v596
  %598 = vmatprep.subr.mxu0 0.0
  %v599 = vand.u32 %v34, 4294901760
  %600 = vmatpush1.msra.mxu0 %v599
  %601 = vmatprep.subr.mxu0 0.0
  %v602 = vand.u32 %v35, 4294901760
  %603 = vmatpush1.msra.mxu0 %v602
  %604 = vmatprep.subr.mxu0 0.0
  %v605 = vand.u32 %v36, 4294901760
  %606 = vmatpush1.msra.mxu0 %v605
  %607 = vmatprep.subr.mxu0 0.0
  %v608 = vand.u32 %v37, 4294901760
  %609 = vmatpush1.msra.mxu0 %v608
  %610 = vmatprep.subr.mxu0 0.0
  %v611 = vand.u32 %v38, 4294901760
  %612 = vmatpush1.msra.mxu0 %v611
  %613 = vmatprep.subr.mxu0 0.0
  %v614 = vand.u32 %v39, 4294901760
  %615 = vmatpush1.msra.mxu0 %v614
  %616 = vmatprep.subr.mxu0 0.0
  %v617 = vand.u32 %v40, 4294901760
  %618 = vmatpush1.msra.mxu0 %v617
  %619 = vmatprep.subr.mxu0 0.0
  %v620 = vand.u32 %v41, 4294901760
  %621 = vmatpush1.msra.mxu0 %v620
  %622 = vmatprep.subr.mxu0 0.0
  %v623 = vand.u32 %v42, 4294901760
  %624 = vmatpush1.msra.mxu0 %v623
  %625 = vmatprep.subr.mxu0 0.0
  %v626 = vand.u32 %v43, 4294901760
  %627 = vmatpush1.msra.mxu0 %v626
  %628 = vmatprep.subr.mxu0 0.0
  %v629 = vand.u32 %v44, 4294901760
  %630 = vmatpush1.msra.mxu0 %v629
  %631 = vmatprep.subr.mxu0 0.0
  %v632 = vand.u32 %v45, 4294901760
  %633 = vmatpush1.msra.mxu0 %v632
  %634 = vmatprep.subr.mxu0 0.0
  %v635 = vand.u32 %v46, 4294901760
  %636 = vmatpush1.msra.mxu0 %v635
  %637 = vmatprep.subr.mxu0 0.0
  %v638 = vand.u32 %v47, 4294901760
  %639 = vmatpush1.msra.mxu0 %v638
  %640 = vmatprep.subr.mxu0 0.0
  %v641 = vand.u32 %v48, 4294901760
  %642 = vmatpush1.msra.mxu0 %v641
  %643 = vmatprep.subr.mxu0 0.0
  %v644 = vand.u32 %v49, 4294901760
  %645 = vmatpush1.msra.mxu0 %v644
  %v646 = vand.u32 %v16, 4294901760
  %v647 = vsub.f32 %v16, %v646
  %v648 = vand.u32 %v647, 4294901760
  %649 = vmatprep.mubr.f32.mxu0 %v648
  %v650 = vand.u32 %v15, 4294901760
  %v651 = vsub.f32 %v15, %v650
  %v652 = vand.u32 %v651, 4294901760
  %653 = vmatmul.mubr.f32.gmra.mrb[0].mxu0 %v652
  %v654 = vpop.f32.mrb[0].mxu0
  %v655 = vadd.f32 %v547, %v654
  %v656 = vpop.f32.mrb[0].mxu0
  %657 = vdwg.mxu0
  %658 = vmatprep.subr.mxu0 0.0
  %v659 = vand.u32 %v18, 4294901760
  %v660 = vsub.f32 %v18, %v659
  %v661 = vand.u32 %v660, 4294901760
  %662 = vmatpush1.msra.mxu0 %v661
  %663 = vmatprep.subr.mxu0 0.0
  %v664 = vand.u32 %v19, 4294901760
  %v665 = vsub.f32 %v19, %v664
  %v666 = vand.u32 %v665, 4294901760
  %667 = vmatpush1.msra.mxu0 %v666
  %668 = vmatprep.subr.mxu0 0.0
  %v669 = vand.u32 %v20, 4294901760
  %v670 = vsub.f32 %v20, %v669
  %v671 = vand.u32 %v670, 4294901760
  %672 = vmatpush1.msra.mxu0 %v671
  %673 = vmatprep.subr.mxu0 0.0
  %v674 = vand.u32 %v21, 4294901760
  %v675 = vsub.f32 %v21, %v674
  %v676 = vand.u32 %v675, 4294901760
  %677 = vmatpush1.msra.mxu0 %v676
  %678 = vmatprep.subr.mxu0 0.0
  %v679 = vand.u32 %v22, 4294901760
  %v680 = vsub.f32 %v22, %v679
  %v681 = vand.u32 %v680, 4294901760
  %682 = vmatpush1.msra.mxu0 %v681
  %683 = vmatprep.subr.mxu0 0.0
  %v684 = vand.u32 %v23, 4294901760
  %v685 = vsub.f32 %v23, %v684
  %v686 = vand.u32 %v685, 4294901760
  %687 = vmatpush1.msra.mxu0 %v686
  %688 = vmatprep.subr.mxu0 0.0
  %v689 = vand.u32 %v24, 4294901760
  %v690 = vsub.f32 %v24, %v689
  %v691 = vand.u32 %v690, 4294901760
  %692 = vmatpush1.msra.mxu0 %v691
  %693 = vmatprep.subr.mxu0 0.0
  %v694 = vand.u32 %v25, 4294901760
  %v695 = vsub.f32 %v25, %v694
  %v696 = vand.u32 %v695, 4294901760
  %697 = vmatpush1.msra.mxu0 %v696
  %698 = vmatprep.subr.mxu0 0.0
  %v699 = vand.u32 %v26, 4294901760
  %v700 = vsub.f32 %v26, %v699
  %v701 = vand.u32 %v700, 4294901760
  %702 = vmatpush1.msra.mxu0 %v701
  %703 = vmatprep.subr.mxu0 0.0
  %v704 = vand.u32 %v27, 4294901760
  %v705 = vsub.f32 %v27, %v704
  %v706 = vand.u32 %v705, 4294901760
  %707 = vmatpush1.msra.mxu0 %v706
  %708 = vmatprep.subr.mxu0 0.0
  %v709 = vand.u32 %v28, 4294901760
  %v710 = vsub.f32 %v28, %v709
  %v711 = vand.u32 %v710, 4294901760
  %712 = vmatpush1.msra.mxu0 %v711
  %713 = vmatprep.subr.mxu0 0.0
  %v714 = vand.u32 %v29, 4294901760
  %v715 = vsub.f32 %v29, %v714
  %v716 = vand.u32 %v715, 4294901760
  %717 = vmatpush1.msra.mxu0 %v716
  %718 = vmatprep.subr.mxu0 0.0
  %v719 = vand.u32 %v30, 4294901760
  %v720 = vsub.f32 %v30, %v719
  %v721 = vand.u32 %v720, 4294901760
  %722 = vmatpush1.msra.mxu0 %v721
  %723 = vmatprep.subr.mxu0 0.0
  %v724 = vand.u32 %v31, 4294901760
  %v725 = vsub.f32 %v31, %v724
  %v726 = vand.u32 %v725, 4294901760
  %727 = vmatpush1.msra.mxu0 %v726
  %728 = vmatprep.subr.mxu0 0.0
  %v729 = vand.u32 %v32, 4294901760
  %v730 = vsub.f32 %v32, %v729
  %v731 = vand.u32 %v730, 4294901760
  %732 = vmatpush1.msra.mxu0 %v731
  %733 = vmatprep.subr.mxu0 0.0
  %v734 = vand.u32 %v33, 4294901760
  %v735 = vsub.f32 %v33, %v734
  %v736 = vand.u32 %v735, 4294901760
  %737 = vmatpush1.msra.mxu0 %v736
  %738 = vmatprep.subr.mxu0 0.0
  %v739 = vand.u32 %v34, 4294901760
  %v740 = vsub.f32 %v34, %v739
  %v741 = vand.u32 %v740, 4294901760
  %742 = vmatpush1.msra.mxu0 %v741
  %743 = vmatprep.subr.mxu0 0.0
  %v744 = vand.u32 %v35, 4294901760
  %v745 = vsub.f32 %v35, %v744
  %v746 = vand.u32 %v745, 4294901760
  %747 = vmatpush1.msra.mxu0 %v746
  %748 = vmatprep.subr.mxu0 0.0
  %v749 = vand.u32 %v36, 4294901760
  %v750 = vsub.f32 %v36, %v749
  %v751 = vand.u32 %v750, 4294901760
  %752 = vmatpush1.msra.mxu0 %v751
  %753 = vmatprep.subr.mxu0 0.0
  %v754 = vand.u32 %v37, 4294901760
  %v755 = vsub.f32 %v37, %v754
  %v756 = vand.u32 %v755, 4294901760
  %757 = vmatpush1.msra.mxu0 %v756
  %758 = vmatprep.subr.mxu0 0.0
  %v759 = vand.u32 %v38, 4294901760
  %v760 = vsub.f32 %v38, %v759
  %v761 = vand.u32 %v760, 4294901760
  %762 = vmatpush1.msra.mxu0 %v761
  %763 = vmatprep.subr.mxu0 0.0
  %v764 = vand.u32 %v39, 4294901760
  %v765 = vsub.f32 %v39, %v764
  %v766 = vand.u32 %v765, 4294901760
  %767 = vmatpush1.msra.mxu0 %v766
  %768 = vmatprep.subr.mxu0 0.0
  %v769 = vand.u32 %v40, 4294901760
  %v770 = vsub.f32 %v40, %v769
  %v771 = vand.u32 %v770, 4294901760
  %772 = vmatpush1.msra.mxu0 %v771
  %773 = vmatprep.subr.mxu0 0.0
  %v774 = vand.u32 %v41, 4294901760
  %v775 = vsub.f32 %v41, %v774
  %v776 = vand.u32 %v775, 4294901760
  %777 = vmatpush1.msra.mxu0 %v776
  %778 = vmatprep.subr.mxu0 0.0
  %v779 = vand.u32 %v42, 4294901760
  %v780 = vsub.f32 %v42, %v779
  %v781 = vand.u32 %v780, 4294901760
  %782 = vmatpush1.msra.mxu0 %v781
  %783 = vmatprep.subr.mxu0 0.0
  %v784 = vand.u32 %v43, 4294901760
  %v785 = vsub.f32 %v43, %v784
  %v786 = vand.u32 %v785, 4294901760
  %787 = vmatpush1.msra.mxu0 %v786
  %788 = vmatprep.subr.mxu0 0.0
  %v789 = vand.u32 %v44, 4294901760
  %v790 = vsub.f32 %v44, %v789
  %v791 = vand.u32 %v790, 4294901760
  %792 = vmatpush1.msra.mxu0 %v791
  %793 = vmatprep.subr.mxu0 0.0
  %v794 = vand.u32 %v45, 4294901760
  %v795 = vsub.f32 %v45, %v794
  %v796 = vand.u32 %v795, 4294901760
  %797 = vmatpush1.msra.mxu0 %v796
  %798 = vmatprep.subr.mxu0 0.0
  %v799 = vand.u32 %v46, 4294901760
  %v800 = vsub.f32 %v46, %v799
  %v801 = vand.u32 %v800, 4294901760
  %802 = vmatpush1.msra.mxu0 %v801
  %803 = vmatprep.subr.mxu0 0.0
  %v804 = vand.u32 %v47, 4294901760
  %v805 = vsub.f32 %v47, %v804
  %v806 = vand.u32 %v805, 4294901760
  %807 = vmatpush1.msra.mxu0 %v806
  %808 = vmatprep.subr.mxu0 0.0
  %v809 = vand.u32 %v48, 4294901760
  %v810 = vsub.f32 %v48, %v809
  %v811 = vand.u32 %v810, 4294901760
  %812 = vmatpush1.msra.mxu0 %v811
  %813 = vmatprep.subr.mxu0 0.0
  %v814 = vand.u32 %v49, 4294901760
  %v815 = vsub.f32 %v49, %v814
  %v816 = vand.u32 %v815, 4294901760
  %817 = vmatpush1.msra.mxu0 %v816
  %v818 = vand.u32 %v16, 4294901760
  %819 = vmatprep.mubr.f32.mxu0 %v818
  %v820 = vand.u32 %v15, 4294901760
  %821 = vmatmul.mubr.f32.gmra.mrb[0].mxu0 %v820
  %v822 = vpop.f32.mrb[0].mxu0
  %v823 = vadd.f32 %v655, %v822
  %v824 = vpop.f32.mrb[0].mxu0
  %825 = vdwg.mxu0
  %826 = vmatprep.subr.mxu0 0.0
  %v827 = vand.u32 %v18, 4294901760
  %828 = vmatpush1.msra.mxu0 %v827
  %829 = vmatprep.subr.mxu0 0.0
  %v830 = vand.u32 %v19, 4294901760
  %831 = vmatpush1.msra.mxu0 %v830
  %832 = vmatprep.subr.mxu0 0.0
  %v833 = vand.u32 %v20, 4294901760
  %834 = vmatpush1.msra.mxu0 %v833
  %835 = vmatprep.subr.mxu0 0.0
  %v836 = vand.u32 %v21, 4294901760
  %837 = vmatpush1.msra.mxu0 %v836
  %838 = vmatprep.subr.mxu0 0.0
  %v839 = vand.u32 %v22, 4294901760
  %840 = vmatpush1.msra.mxu0 %v839
  %841 = vmatprep.subr.mxu0 0.0
  %v842 = vand.u32 %v23, 4294901760
  %843 = vmatpush1.msra.mxu0 %v842
  %844 = vmatprep.subr.mxu0 0.0
  %v845 = vand.u32 %v24, 4294901760
  %846 = vmatpush1.msra.mxu0 %v845
  %847 = vmatprep.subr.mxu0 0.0
  %v848 = vand.u32 %v25, 4294901760
  %849 = vmatpush1.msra.mxu0 %v848
  %850 = vmatprep.subr.mxu0 0.0
  %v851 = vand.u32 %v26, 4294901760
  %852 = vmatpush1.msra.mxu0 %v851
  %853 = vmatprep.subr.mxu0 0.0
  %v854 = vand.u32 %v27, 4294901760
  %855 = vmatpush1.msra.mxu0 %v854
  %856 = vmatprep.subr.mxu0 0.0
  %v857 = vand.u32 %v28, 4294901760
  %858 = vmatpush1.msra.mxu0 %v857
  %859 = vmatprep.subr.mxu0 0.0
  %v860 = vand.u32 %v29, 4294901760
  %861 = vmatpush1.msra.mxu0 %v860
  %862 = vmatprep.subr.mxu0 0.0
  %v863 = vand.u32 %v30, 4294901760
  %864 = vmatpush1.msra.mxu0 %v863
  %865 = vmatprep.subr.mxu0 0.0
  %v866 = vand.u32 %v31, 4294901760
  %867 = vmatpush1.msra.mxu0 %v866
  %868 = vmatprep.subr.mxu0 0.0
  %v869 = vand.u32 %v32, 4294901760
  %870 = vmatpush1.msra.mxu0 %v869
  %871 = vmatprep.subr.mxu0 0.0
  %v872 = vand.u32 %v33, 4294901760
  %873 = vmatpush1.msra.mxu0 %v872
  %874 = vmatprep.subr.mxu0 0.0
  %v875 = vand.u32 %v34, 4294901760
  %876 = vmatpush1.msra.mxu0 %v875
  %877 = vmatprep.subr.mxu0 0.0
  %v878 = vand.u32 %v35, 4294901760
  %879 = vmatpush1.msra.mxu0 %v878
  %880 = vmatprep.subr.mxu0 0.0
  %v881 = vand.u32 %v36, 4294901760
  %882 = vmatpush1.msra.mxu0 %v881
  %883 = vmatprep.subr.mxu0 0.0
  %v884 = vand.u32 %v37, 4294901760
  %885 = vmatpush1.msra.mxu0 %v884
  %886 = vmatprep.subr.mxu0 0.0
  %v887 = vand.u32 %v38, 4294901760
  %888 = vmatpush1.msra.mxu0 %v887
  %889 = vmatprep.subr.mxu0 0.0
  %v890 = vand.u32 %v39, 4294901760
  %891 = vmatpush1.msra.mxu0 %v890
  %892 = vmatprep.subr.mxu0 0.0
  %v893 = vand.u32 %v40, 4294901760
  %894 = vmatpush1.msra.mxu0 %v893
  %895 = vmatprep.subr.mxu0 0.0
  %v896 = vand.u32 %v41, 4294901760
  %897 = vmatpush1.msra.mxu0 %v896
  %898 = vmatprep.subr.mxu0 0.0
  %v899 = vand.u32 %v42, 4294901760
  %900 = vmatpush1.msra.mxu0 %v899
  %901 = vmatprep.subr.mxu0 0.0
  %v902 = vand.u32 %v43, 4294901760
  %903 = vmatpush1.msra.mxu0 %v902
  %904 = vmatprep.subr.mxu0 0.0
  %v905 = vand.u32 %v44, 4294901760
  %906 = vmatpush1.msra.mxu0 %v905
  %907 = vmatprep.subr.mxu0 0.0
  %v908 = vand.u32 %v45, 4294901760
  %909 = vmatpush1.msra.mxu0 %v908
  %910 = vmatprep.subr.mxu0 0.0
  %v911 = vand.u32 %v46, 4294901760
  %912 = vmatpush1.msra.mxu0 %v911
  %913 = vmatprep.subr.mxu0 0.0
  %v914 = vand.u32 %v47, 4294901760
  %915 = vmatpush1.msra.mxu0 %v914
  %916 = vmatprep.subr.mxu0 0.0
  %v917 = vand.u32 %v48, 4294901760
  %918 = vmatpush1.msra.mxu0 %v917
  %919 = vmatprep.subr.mxu0 0.0
  %v920 = vand.u32 %v49, 4294901760
  %921 = vmatpush1.msra.mxu0 %v920
  %v922 = vand.u32 %v16, 4294901760
  %923 = vmatprep.mubr.f32.mxu0 %v922
  %v924 = vand.u32 %v15, 4294901760
  %925 = vmatmul.mubr.f32.gmra.mrb[0].mxu0 %v924
  %v926 = vpop.f32.mrb[0].mxu0
  %v927 = vadd.f32 %v823, %v926
  %v928 = vpop.f32.mrb[0].mxu0
  %929 = vdwg.mxu0
  %930 = vmatprep.subr.mxu0 0.0
  %v931 = vand.u32 %v50, 4294901760
  %932 = vmatpush1.msra.mxu0 %v931
  %933 = vmatprep.subr.mxu0 0.0
  %v934 = vand.u32 %v51, 4294901760
  %935 = vmatpush1.msra.mxu0 %v934
  %936 = vmatprep.subr.mxu0 0.0
  %v937 = vand.u32 %v52, 4294901760
  %938 = vmatpush1.msra.mxu0 %v937
  %939 = vmatprep.subr.mxu0 0.0
  %v940 = vand.u32 %v53, 4294901760
  %941 = vmatpush1.msra.mxu0 %v940
  %942 = vmatprep.subr.mxu0 0.0
  %v943 = vand.u32 %v54, 4294901760
  %944 = vmatpush1.msra.mxu0 %v943
  %945 = vmatprep.subr.mxu0 0.0
  %v946 = vand.u32 %v55, 4294901760
  %947 = vmatpush1.msra.mxu0 %v946
  %948 = vmatprep.subr.mxu0 0.0
  %v949 = vand.u32 %v56, 4294901760
  %950 = vmatpush1.msra.mxu0 %v949
  %951 = vmatprep.subr.mxu0 0.0
  %v952 = vand.u32 %v57, 4294901760
  %953 = vmatpush1.msra.mxu0 %v952
  %954 = vmatprep.subr.mxu0 0.0
  %v955 = vand.u32 %v58, 4294901760
  %956 = vmatpush1.msra.mxu0 %v955
  %957 = vmatprep.subr.mxu0 0.0
  %v958 = vand.u32 %v59, 4294901760
  %959 = vmatpush1.msra.mxu0 %v958
  %960 = vmatprep.subr.mxu0 0.0
  %v961 = vand.u32 %v60, 4294901760
  %962 = vmatpush1.msra.mxu0 %v961
  %963 = vmatprep.subr.mxu0 0.0
  %v964 = vand.u32 %v61, 4294901760
  %965 = vmatpush1.msra.mxu0 %v964
  %966 = vmatprep.subr.mxu0 0.0
  %v967 = vand.u32 %v62, 4294901760
  %968 = vmatpush1.msra.mxu0 %v967
  %969 = vmatprep.subr.mxu0 0.0
  %v970 = vand.u32 %v63, 4294901760
  %971 = vmatpush1.msra.mxu0 %v970
  %972 = vmatprep.subr.mxu0 0.0
  %v973 = vand.u32 %v64, 4294901760
  %974 = vmatpush1.msra.mxu0 %v973
  %975 = vmatprep.subr.mxu0 0.0
  %v976 = vand.u32 %v65, 4294901760
  %977 = vmatpush1.msra.mxu0 %v976
  %978 = vmatprep.subr.mxu0 0.0
  %979 = vmatpush1.msra.mxu0 0.0
  %980 = vmatprep.subr.mxu0 0.0
  %981 = vmatpush1.msra.mxu0 0.0
  %982 = vmatprep.subr.mxu0 0.0
  %983 = vmatpush1.msra.mxu0 0.0
  %984 = vmatprep.subr.mxu0 0.0
  %985 = vmatpush1.msra.mxu0 0.0
  %986 = vmatprep.subr.mxu0 0.0
  %987 = vmatpush1.msra.mxu0 0.0
  %988 = vmatprep.subr.mxu0 0.0
  %989 = vmatpush1.msra.mxu0 0.0
  %990 = vmatprep.subr.mxu0 0.0
  %991 = vmatpush1.msra.mxu0 0.0
  %992 = vmatprep.subr.mxu0 0.0
  %993 = vmatpush1.msra.mxu0 0.0
  %994 = vmatprep.subr.mxu0 0.0
  %995 = vmatpush1.msra.mxu0 0.0
  %996 = vmatprep.subr.mxu0 0.0
  %997 = vmatpush1.msra.mxu0 0.0
  %998 = vmatprep.subr.mxu0 0.0
  %999 = vmatpush1.msra.mxu0 0.0
  %1000 = vmatprep.subr.mxu0 0.0
  %1001 = vmatpush1.msra.mxu0 0.0
  %1002 = vmatprep.subr.mxu0 0.0
  %1003 = vmatpush1.msra.mxu0 0.0
  %1004 = vmatprep.subr.mxu0 0.0
  %1005 = vmatpush1.msra.mxu0 0.0
  %1006 = vmatprep.subr.mxu0 0.0
  %1007 = vmatpush1.msra.mxu0 0.0
  %1008 = vmatprep.subr.mxu0 0.0
  %1009 = vmatpush1.msra.mxu0 0.0
  %1010 = vmatprep.mubr.f32.mxu0 0.0
  %v1011 = vand.u32 %v17, 4294901760
  %v1012 = vsub.f32 %v17, %v1011
  %v1013 = vand.u32 %v1012, 4294901760
  %v1014 = vsub.f32 %v1012, %v1013
  %v1015 = vand.u32 %v1014, 4294901760
  %1016 = vmatmul.mubr.f32.gmra.mrb[0].mxu0 %v1015
  %v1017 = vpop.f32.mrb[0].mxu0
  %v1018 = vadd.f32 %v927, %v1017
  %v1019 = vpop.f32.mrb[0].mxu0
  %1020 = vdwg.mxu0
  %1021 = vmatprep.subr.mxu0 0.0
  %v1022 = vand.u32 %v50, 4294901760
  %v1023 = vsub.f32 %v50, %v1022
  %v1024 = vand.u32 %v1023, 4294901760
  %v1025 = vsub.f32 %v1023, %v1024
  %v1026 = vand.u32 %v1025, 4294901760
  %1027 = vmatpush1.msra.mxu0 %v1026
  %1028 = vmatprep.subr.mxu0 0.0
  %v1029 = vand.u32 %v51, 4294901760
  %v1030 = vsub.f32 %v51, %v1029
  %v1031 = vand.u32 %v1030, 4294901760
  %v1032 = vsub.f32 %v1030, %v1031
  %v1033 = vand.u32 %v1032, 4294901760
  %1034 = vmatpush1.msra.mxu0 %v1033
  %1035 = vmatprep.subr.mxu0 0.0
  %v1036 = vand.u32 %v52, 4294901760
  %v1037 = vsub.f32 %v52, %v1036
  %v1038 = vand.u32 %v1037, 4294901760
  %v1039 = vsub.f32 %v1037, %v1038
  %v1040 = vand.u32 %v1039, 4294901760
  %1041 = vmatpush1.msra.mxu0 %v1040
  %1042 = vmatprep.subr.mxu0 0.0
  %v1043 = vand.u32 %v53, 4294901760
  %v1044 = vsub.f32 %v53, %v1043
  %v1045 = vand.u32 %v1044, 4294901760
  %v1046 = vsub.f32 %v1044, %v1045
  %v1047 = vand.u32 %v1046, 4294901760
  %1048 = vmatpush1.msra.mxu0 %v1047
  %1049 = vmatprep.subr.mxu0 0.0
  %v1050 = vand.u32 %v54, 4294901760
  %v1051 = vsub.f32 %v54, %v1050
  %v1052 = vand.u32 %v1051, 4294901760
  %v1053 = vsub.f32 %v1051, %v1052
  %v1054 = vand.u32 %v1053, 4294901760
  %1055 = vmatpush1.msra.mxu0 %v1054
  %1056 = vmatprep.subr.mxu0 0.0
  %v1057 = vand.u32 %v55, 4294901760
  %v1058 = vsub.f32 %v55, %v1057
  %v1059 = vand.u32 %v1058, 4294901760
  %v1060 = vsub.f32 %v1058, %v1059
  %v1061 = vand.u32 %v1060, 4294901760
  %1062 = vmatpush1.msra.mxu0 %v1061
  %1063 = vmatprep.subr.mxu0 0.0
  %v1064 = vand.u32 %v56, 4294901760
  %v1065 = vsub.f32 %v56, %v1064
  %v1066 = vand.u32 %v1065, 4294901760
  %v1067 = vsub.f32 %v1065, %v1066
  %v1068 = vand.u32 %v1067, 4294901760
  %1069 = vmatpush1.msra.mxu0 %v1068
  %1070 = vmatprep.subr.mxu0 0.0
  %v1071 = vand.u32 %v57, 4294901760
  %v1072 = vsub.f32 %v57, %v1071
  %v1073 = vand.u32 %v1072, 4294901760
  %v1074 = vsub.f32 %v1072, %v1073
  %v1075 = vand.u32 %v1074, 4294901760
  %1076 = vmatpush1.msra.mxu0 %v1075
  %1077 = vmatprep.subr.mxu0 0.0
  %v1078 = vand.u32 %v58, 4294901760
  %v1079 = vsub.f32 %v58, %v1078
  %v1080 = vand.u32 %v1079, 4294901760
  %v1081 = vsub.f32 %v1079, %v1080
  %v1082 = vand.u32 %v1081, 4294901760
  %1083 = vmatpush1.msra.mxu0 %v1082
  %1084 = vmatprep.subr.mxu0 0.0
  %v1085 = vand.u32 %v59, 4294901760
  %v1086 = vsub.f32 %v59, %v1085
  %v1087 = vand.u32 %v1086, 4294901760
  %v1088 = vsub.f32 %v1086, %v1087
  %v1089 = vand.u32 %v1088, 4294901760
  %1090 = vmatpush1.msra.mxu0 %v1089
  %1091 = vmatprep.subr.mxu0 0.0
  %v1092 = vand.u32 %v60, 4294901760
  %v1093 = vsub.f32 %v60, %v1092
  %v1094 = vand.u32 %v1093, 4294901760
  %v1095 = vsub.f32 %v1093, %v1094
  %v1096 = vand.u32 %v1095, 4294901760
  %1097 = vmatpush1.msra.mxu0 %v1096
  %1098 = vmatprep.subr.mxu0 0.0
  %v1099 = vand.u32 %v61, 4294901760
  %v1100 = vsub.f32 %v61, %v1099
  %v1101 = vand.u32 %v1100, 4294901760
  %v1102 = vsub.f32 %v1100, %v1101
  %v1103 = vand.u32 %v1102, 4294901760
  %1104 = vmatpush1.msra.mxu0 %v1103
  %1105 = vmatprep.subr.mxu0 0.0
  %v1106 = vand.u32 %v62, 4294901760
  %v1107 = vsub.f32 %v62, %v1106
  %v1108 = vand.u32 %v1107, 4294901760
  %v1109 = vsub.f32 %v1107, %v1108
  %v1110 = vand.u32 %v1109, 4294901760
  %1111 = vmatpush1.msra.mxu0 %v1110
  %1112 = vmatprep.subr.mxu0 0.0
  %v1113 = vand.u32 %v63, 4294901760
  %v1114 = vsub.f32 %v63, %v1113
  %v1115 = vand.u32 %v1114, 4294901760
  %v1116 = vsub.f32 %v1114, %v1115
  %v1117 = vand.u32 %v1116, 4294901760
  %1118 = vmatpush1.msra.mxu0 %v1117
  %1119 = vmatprep.subr.mxu0 0.0
  %v1120 = vand.u32 %v64, 4294901760
  %v1121 = vsub.f32 %v64, %v1120
  %v1122 = vand.u32 %v1121, 4294901760
  %v1123 = vsub.f32 %v1121, %v1122
  %v1124 = vand.u32 %v1123, 4294901760
  %1125 = vmatpush1.msra.mxu0 %v1124
  %1126 = vmatprep.subr.mxu0 0.0
  %v1127 = vand.u32 %v65, 4294901760
  %v1128 = vsub.f32 %v65, %v1127
  %v1129 = vand.u32 %v1128, 4294901760
  %v1130 = vsub.f32 %v1128, %v1129
  %v1131 = vand.u32 %v1130, 4294901760
  %1132 = vmatpush1.msra.mxu0 %v1131
  %1133 = vmatprep.subr.mxu0 0.0
  %1134 = vmatpush1.msra.mxu0 0.0
  %1135 = vmatprep.subr.mxu0 0.0
  %1136 = vmatpush1.msra.mxu0 0.0
  %1137 = vmatprep.subr.mxu0 0.0
  %1138 = vmatpush1.msra.mxu0 0.0
  %1139 = vmatprep.subr.mxu0 0.0
  %1140 = vmatpush1.msra.mxu0 0.0
  %1141 = vmatprep.subr.mxu0 0.0
  %1142 = vmatpush1.msra.mxu0 0.0
  %1143 = vmatprep.subr.mxu0 0.0
  %1144 = vmatpush1.msra.mxu0 0.0
  %1145 = vmatprep.subr.mxu0 0.0
  %1146 = vmatpush1.msra.mxu0 0.0
  %1147 = vmatprep.subr.mxu0 0.0
  %1148 = vmatpush1.msra.mxu0 0.0
  %1149 = vmatprep.subr.mxu0 0.0
  %1150 = vmatpush1.msra.mxu0 0.0
  %1151 = vmatprep.subr.mxu0 0.0
  %1152 = vmatpush1.msra.mxu0 0.0
  %1153 = vmatprep.subr.mxu0 0.0
  %1154 = vmatpush1.msra.mxu0 0.0
  %1155 = vmatprep.subr.mxu0 0.0
  %1156 = vmatpush1.msra.mxu0 0.0
  %1157 = vmatprep.subr.mxu0 0.0
  %1158 = vmatpush1.msra.mxu0 0.0
  %1159 = vmatprep.subr.mxu0 0.0
  %1160 = vmatpush1.msra.mxu0 0.0
  %1161 = vmatprep.subr.mxu0 0.0
  %1162 = vmatpush1.msra.mxu0 0.0
  %1163 = vmatprep.subr.mxu0 0.0
  %1164 = vmatpush1.msra.mxu0 0.0
  %1165 = vmatprep.mubr.f32.mxu0 0.0
  %v1166 = vand.u32 %v17, 4294901760
  %1167 = vmatmul.mubr.f32.gmra.mrb[0].mxu0 %v1166
  %v1168 = vpop.f32.mrb[0].mxu0
  %v1169 = vadd.f32 %v1018, %v1168
  %v1170 = vpop.f32.mrb[0].mxu0
  %1171 = vdwg.mxu0
  %1172 = vmatprep.subr.mxu0 0.0
  %v1173 = vand.u32 %v50, 4294901760
  %v1174 = vsub.f32 %v50, %v1173
  %1175 = vmatpush1.msra.mxu0 %v1174
  %1176 = vmatprep.subr.mxu0 0.0
  %v1177 = vand.u32 %v51, 4294901760
  %v1178 = vsub.f32 %v51, %v1177
  %1179 = vmatpush1.msra.mxu0 %v1178
  %1180 = vmatprep.subr.mxu0 0.0
  %v1181 = vand.u32 %v52, 4294901760
  %v1182 = vsub.f32 %v52, %v1181
  %1183 = vmatpush1.msra.mxu0 %v1182
  %1184 = vmatprep.subr.mxu0 0.0
  %v1185 = vand.u32 %v53, 4294901760
  %v1186 = vsub.f32 %v53, %v1185
  %1187 = vmatpush1.msra.mxu0 %v1186
  %1188 = vmatprep.subr.mxu0 0.0
  %v1189 = vand.u32 %v54, 4294901760
  %v1190 = vsub.f32 %v54, %v1189
  %1191 = vmatpush1.msra.mxu0 %v1190
  %1192 = vmatprep.subr.mxu0 0.0
  %v1193 = vand.u32 %v55, 4294901760
  %v1194 = vsub.f32 %v55, %v1193
  %1195 = vmatpush1.msra.mxu0 %v1194
  %1196 = vmatprep.subr.mxu0 0.0
  %v1197 = vand.u32 %v56, 4294901760
  %v1198 = vsub.f32 %v56, %v1197
  %1199 = vmatpush1.msra.mxu0 %v1198
  %1200 = vmatprep.subr.mxu0 0.0
  %v1201 = vand.u32 %v57, 4294901760
  %v1202 = vsub.f32 %v57, %v1201
  %1203 = vmatpush1.msra.mxu0 %v1202
  %1204 = vmatprep.subr.mxu0 0.0
  %v1205 = vand.u32 %v58, 4294901760
  %v1206 = vsub.f32 %v58, %v1205
  %1207 = vmatpush1.msra.mxu0 %v1206
  %1208 = vmatprep.subr.mxu0 0.0
  %v1209 = vand.u32 %v59, 4294901760
  %v1210 = vsub.f32 %v59, %v1209
  %1211 = vmatpush1.msra.mxu0 %v1210
  %1212 = vmatprep.subr.mxu0 0.0
  %v1213 = vand.u32 %v60, 4294901760
  %v1214 = vsub.f32 %v60, %v1213
  %1215 = vmatpush1.msra.mxu0 %v1214
  %1216 = vmatprep.subr.mxu0 0.0
  %v1217 = vand.u32 %v61, 4294901760
  %v1218 = vsub.f32 %v61, %v1217
  %1219 = vmatpush1.msra.mxu0 %v1218
  %1220 = vmatprep.subr.mxu0 0.0
  %v1221 = vand.u32 %v62, 4294901760
  %v1222 = vsub.f32 %v62, %v1221
  %1223 = vmatpush1.msra.mxu0 %v1222
  %1224 = vmatprep.subr.mxu0 0.0
  %v1225 = vand.u32 %v63, 4294901760
  %v1226 = vsub.f32 %v63, %v1225
  %1227 = vmatpush1.msra.mxu0 %v1226
  %1228 = vmatprep.subr.mxu0 0.0
  %v1229 = vand.u32 %v64, 4294901760
  %v1230 = vsub.f32 %v64, %v1229
  %1231 = vmatpush1.msra.mxu0 %v1230
  %1232 = vmatprep.subr.mxu0 0.0
  %v1233 = vand.u32 %v65, 4294901760
  %v1234 = vsub.f32 %v65, %v1233
  %1235 = vmatpush1.msra.mxu0 %v1234
  %1236 = vmatprep.subr.mxu0 0.0
  %1237 = vmatpush1.msra.mxu0 0.0
  %1238 = vmatprep.subr.mxu0 0.0
  %1239 = vmatpush1.msra.mxu0 0.0
  %1240 = vmatprep.subr.mxu0 0.0
  %1241 = vmatpush1.msra.mxu0 0.0
  %1242 = vmatprep.subr.mxu0 0.0
  %1243 = vmatpush1.msra.mxu0 0.0
  %1244 = vmatprep.subr.mxu0 0.0
  %1245 = vmatpush1.msra.mxu0 0.0
  %1246 = vmatprep.subr.mxu0 0.0
  %1247 = vmatpush1.msra.mxu0 0.0
  %1248 = vmatprep.subr.mxu0 0.0
  %1249 = vmatpush1.msra.mxu0 0.0
  %1250 = vmatprep.subr.mxu0 0.0
  %1251 = vmatpush1.msra.mxu0 0.0
  %1252 = vmatprep.subr.mxu0 0.0
  %1253 = vmatpush1.msra.mxu0 0.0
  %1254 = vmatprep.subr.mxu0 0.0
  %1255 = vmatpush1.msra.mxu0 0.0
  %1256 = vmatprep.subr.mxu0 0.0
  %1257 = vmatpush1.msra.mxu0 0.0
  %1258 = vmatprep.subr.mxu0 0.0
  %1259 = vmatpush1.msra.mxu0 0.0
  %1260 = vmatprep.subr.mxu0 0.0
  %1261 = vmatpush1.msra.mxu0 0.0
  %1262 = vmatprep.subr.mxu0 0.0
  %1263 = vmatpush1.msra.mxu0 0.0
  %1264 = vmatprep.subr.mxu0 0.0
  %1265 = vmatpush1.msra.mxu0 0.0
  %1266 = vmatprep.subr.mxu0 0.0
  %1267 = vmatpush1.msra.mxu0 0.0
  %1268 = vmatprep.mubr.f32.mxu0 0.0
  %v1269 = vand.u32 %v17, 4294901760
  %v1270 = vsub.f32 %v17, %v1269
  %1271 = vmatmul.mubr.f32.gmra.mrb[0].mxu0 %v1270
  %v1272 = vpop.f32.mrb[0].mxu0
  %v1273 = vadd.f32 %v1169, %v1272
  %v1274 = vpop.f32.mrb[0].mxu0
  %1275 = vdwg.mxu0
  %1276 = vmatprep.subr.mxu0 0.0
  %v1277 = vand.u32 %v50, 4294901760
  %1278 = vmatpush1.msra.mxu0 %v1277
  %1279 = vmatprep.subr.mxu0 0.0
  %v1280 = vand.u32 %v51, 4294901760
  %1281 = vmatpush1.msra.mxu0 %v1280
  %1282 = vmatprep.subr.mxu0 0.0
  %v1283 = vand.u32 %v52, 4294901760
  %1284 = vmatpush1.msra.mxu0 %v1283
  %1285 = vmatprep.subr.mxu0 0.0
  %v1286 = vand.u32 %v53, 4294901760
  %1287 = vmatpush1.msra.mxu0 %v1286
  %1288 = vmatprep.subr.mxu0 0.0
  %v1289 = vand.u32 %v54, 4294901760
  %1290 = vmatpush1.msra.mxu0 %v1289
  %1291 = vmatprep.subr.mxu0 0.0
  %v1292 = vand.u32 %v55, 4294901760
  %1293 = vmatpush1.msra.mxu0 %v1292
  %1294 = vmatprep.subr.mxu0 0.0
  %v1295 = vand.u32 %v56, 4294901760
  %1296 = vmatpush1.msra.mxu0 %v1295
  %1297 = vmatprep.subr.mxu0 0.0
  %v1298 = vand.u32 %v57, 4294901760
  %1299 = vmatpush1.msra.mxu0 %v1298
  %1300 = vmatprep.subr.mxu0 0.0
  %v1301 = vand.u32 %v58, 4294901760
  %1302 = vmatpush1.msra.mxu0 %v1301
  %1303 = vmatprep.subr.mxu0 0.0
  %v1304 = vand.u32 %v59, 4294901760
  %1305 = vmatpush1.msra.mxu0 %v1304
  %1306 = vmatprep.subr.mxu0 0.0
  %v1307 = vand.u32 %v60, 4294901760
  %1308 = vmatpush1.msra.mxu0 %v1307
  %1309 = vmatprep.subr.mxu0 0.0
  %v1310 = vand.u32 %v61, 4294901760
  %1311 = vmatpush1.msra.mxu0 %v1310
  %1312 = vmatprep.subr.mxu0 0.0
  %v1313 = vand.u32 %v62, 4294901760
  %1314 = vmatpush1.msra.mxu0 %v1313
  %1315 = vmatprep.subr.mxu0 0.0
  %v1316 = vand.u32 %v63, 4294901760
  %1317 = vmatpush1.msra.mxu0 %v1316
  %1318 = vmatprep.subr.mxu0 0.0
  %v1319 = vand.u32 %v64, 4294901760
  %1320 = vmatpush1.msra.mxu0 %v1319
  %1321 = vmatprep.subr.mxu0 0.0
  %v1322 = vand.u32 %v65, 4294901760
  %1323 = vmatpush1.msra.mxu0 %v1322
  %1324 = vmatprep.subr.mxu0 0.0
  %1325 = vmatpush1.msra.mxu0 0.0
  %1326 = vmatprep.subr.mxu0 0.0
  %1327 = vmatpush1.msra.mxu0 0.0
  %1328 = vmatprep.subr.mxu0 0.0
  %1329 = vmatpush1.msra.mxu0 0.0
  %1330 = vmatprep.subr.mxu0 0.0
  %1331 = vmatpush1.msra.mxu0 0.0
  %1332 = vmatprep.subr.mxu0 0.0
  %1333 = vmatpush1.msra.mxu0 0.0
  %1334 = vmatprep.subr.mxu0 0.0
  %1335 = vmatpush1.msra.mxu0 0.0
  %1336 = vmatprep.subr.mxu0 0.0
  %1337 = vmatpush1.msra.mxu0 0.0
  %1338 = vmatprep.subr.mxu0 0.0
  %1339 = vmatpush1.msra.mxu0 0.0
  %1340 = vmatprep.subr.mxu0 0.0
  %1341 = vmatpush1.msra.mxu0 0.0
  %1342 = vmatprep.subr.mxu0 0.0
  %1343 = vmatpush1.msra.mxu0 0.0
  %1344 = vmatprep.subr.mxu0 0.0
  %1345 = vmatpush1.msra.mxu0 0.0
  %1346 = vmatprep.subr.mxu0 0.0
  %1347 = vmatpush1.msra.mxu0 0.0
  %1348 = vmatprep.subr.mxu0 0.0
  %1349 = vmatpush1.msra.mxu0 0.0
  %1350 = vmatprep.subr.mxu0 0.0
  %1351 = vmatpush1.msra.mxu0 0.0
  %1352 = vmatprep.subr.mxu0 0.0
  %1353 = vmatpush1.msra.mxu0 0.0
  %1354 = vmatprep.subr.mxu0 0.0
  %1355 = vmatpush1.msra.mxu0 0.0
  %1356 = vmatprep.mubr.f32.mxu0 0.0
  %v1357 = vand.u32 %v17, 4294901760
  %v1358 = vsub.f32 %v17, %v1357
  %v1359 = vand.u32 %v1358, 4294901760
  %1360 = vmatmul.mubr.f32.gmra.mrb[0].mxu0 %v1359
  %v1361 = vpop.f32.mrb[0].mxu0
  %v1362 = vadd.f32 %v1273, %v1361
  %v1363 = vpop.f32.mrb[0].mxu0
  %1364 = vdwg.mxu0
  %1365 = vmatprep.subr.mxu0 0.0
  %v1366 = vand.u32 %v50, 4294901760
  %v1367 = vsub.f32 %v50, %v1366
  %v1368 = vand.u32 %v1367, 4294901760
  %1369 = vmatpush1.msra.mxu0 %v1368
  %1370 = vmatprep.subr.mxu0 0.0
  %v1371 = vand.u32 %v51, 4294901760
  %v1372 = vsub.f32 %v51, %v1371
  %v1373 = vand.u32 %v1372, 4294901760
  %1374 = vmatpush1.msra.mxu0 %v1373
  %1375 = vmatprep.subr.mxu0 0.0
  %v1376 = vand.u32 %v52, 4294901760
  %v1377 = vsub.f32 %v52, %v1376
  %v1378 = vand.u32 %v1377, 4294901760
  %1379 = vmatpush1.msra.mxu0 %v1378
  %1380 = vmatprep.subr.mxu0 0.0
  %v1381 = vand.u32 %v53, 4294901760
  %v1382 = vsub.f32 %v53, %v1381
  %v1383 = vand.u32 %v1382, 4294901760
  %1384 = vmatpush1.msra.mxu0 %v1383
  %1385 = vmatprep.subr.mxu0 0.0
  %v1386 = vand.u32 %v54, 4294901760
  %v1387 = vsub.f32 %v54, %v1386
  %v1388 = vand.u32 %v1387, 4294901760
  %1389 = vmatpush1.msra.mxu0 %v1388
  %1390 = vmatprep.subr.mxu0 0.0
  %v1391 = vand.u32 %v55, 4294901760
  %v1392 = vsub.f32 %v55, %v1391
  %v1393 = vand.u32 %v1392, 4294901760
  %1394 = vmatpush1.msra.mxu0 %v1393
  %1395 = vmatprep.subr.mxu0 0.0
  %v1396 = vand.u32 %v56, 4294901760
  %v1397 = vsub.f32 %v56, %v1396
  %v1398 = vand.u32 %v1397, 4294901760
  %1399 = vmatpush1.msra.mxu0 %v1398
  %1400 = vmatprep.subr.mxu0 0.0
  %v1401 = vand.u32 %v57, 4294901760
  %v1402 = vsub.f32 %v57, %v1401
  %v1403 = vand.u32 %v1402, 4294901760
  %1404 = vmatpush1.msra.mxu0 %v1403
  %1405 = vmatprep.subr.mxu0 0.0
  %v1406 = vand.u32 %v58, 4294901760
  %v1407 = vsub.f32 %v58, %v1406
  %v1408 = vand.u32 %v1407, 4294901760
  %1409 = vmatpush1.msra.mxu0 %v1408
  %1410 = vmatprep.subr.mxu0 0.0
  %v1411 = vand.u32 %v59, 4294901760
  %v1412 = vsub.f32 %v59, %v1411
  %v1413 = vand.u32 %v1412, 4294901760
  %1414 = vmatpush1.msra.mxu0 %v1413
  %1415 = vmatprep.subr.mxu0 0.0
  %v1416 = vand.u32 %v60, 4294901760
  %v1417 = vsub.f32 %v60, %v1416
  %v1418 = vand.u32 %v1417, 4294901760
  %1419 = vmatpush1.msra.mxu0 %v1418
  %1420 = vmatprep.subr.mxu0 0.0
  %v1421 = vand.u32 %v61, 4294901760
  %v1422 = vsub.f32 %v61, %v1421
  %v1423 = vand.u32 %v1422, 4294901760
  %1424 = vmatpush1.msra.mxu0 %v1423
  %1425 = vmatprep.subr.mxu0 0.0
  %v1426 = vand.u32 %v62, 4294901760
  %v1427 = vsub.f32 %v62, %v1426
  %v1428 = vand.u32 %v1427, 4294901760
  %1429 = vmatpush1.msra.mxu0 %v1428
  %1430 = vmatprep.subr.mxu0 0.0
  %v1431 = vand.u32 %v63, 4294901760
  %v1432 = vsub.f32 %v63, %v1431
  %v1433 = vand.u32 %v1432, 4294901760
  %1434 = vmatpush1.msra.mxu0 %v1433
  %1435 = vmatprep.subr.mxu0 0.0
  %v1436 = vand.u32 %v64, 4294901760
  %v1437 = vsub.f32 %v64, %v1436
  %v1438 = vand.u32 %v1437, 4294901760
  %1439 = vmatpush1.msra.mxu0 %v1438
  %1440 = vmatprep.subr.mxu0 0.0
  %v1441 = vand.u32 %v65, 4294901760
  %v1442 = vsub.f32 %v65, %v1441
  %v1443 = vand.u32 %v1442, 4294901760
  %1444 = vmatpush1.msra.mxu0 %v1443
  %1445 = vmatprep.subr.mxu0 0.0
  %1446 = vmatpush1.msra.mxu0 0.0
  %1447 = vmatprep.subr.mxu0 0.0
  %1448 = vmatpush1.msra.mxu0 0.0
  %1449 = vmatprep.subr.mxu0 0.0
  %1450 = vmatpush1.msra.mxu0 0.0
  %1451 = vmatprep.subr.mxu0 0.0
  %1452 = vmatpush1.msra.mxu0 0.0
  %1453 = vmatprep.subr.mxu0 0.0
  %1454 = vmatpush1.msra.mxu0 0.0
  %1455 = vmatprep.subr.mxu0 0.0
  %1456 = vmatpush1.msra.mxu0 0.0
  %1457 = vmatprep.subr.mxu0 0.0
  %1458 = vmatpush1.msra.mxu0 0.0
  %1459 = vmatprep.subr.mxu0 0.0
  %1460 = vmatpush1.msra.mxu0 0.0
  %1461 = vmatprep.subr.mxu0 0.0
  %1462 = vmatpush1.msra.mxu0 0.0
  %1463 = vmatprep.subr.mxu0 0.0
  %1464 = vmatpush1.msra.mxu0 0.0
  %1465 = vmatprep.subr.mxu0 0.0
  %1466 = vmatpush1.msra.mxu0 0.0
  %1467 = vmatprep.subr.mxu0 0.0
  %1468 = vmatpush1.msra.mxu0 0.0
  %1469 = vmatprep.subr.mxu0 0.0
  %1470 = vmatpush1.msra.mxu0 0.0
  %1471 = vmatprep.subr.mxu0 0.0
  %1472 = vmatpush1.msra.mxu0 0.0
  %1473 = vmatprep.subr.mxu0 0.0
  %1474 = vmatpush1.msra.mxu0 0.0
  %1475 = vmatprep.subr.mxu0 0.0
  %1476 = vmatpush1.msra.mxu0 0.0
  %1477 = vmatprep.mubr.f32.mxu0 0.0
  %v1478 = vand.u32 %v17, 4294901760
  %1479 = vmatmul.mubr.f32.gmra.mrb[0].mxu0 %v1478
  %v1480 = vpop.f32.mrb[0].mxu0
  %v1481 = vadd.f32 %v1362, %v1480
  %v1482 = vpop.f32.mrb[0].mxu0
  %1483 = vdwg.mxu0
  %1484 = vmatprep.subr.mxu0 0.0
  %v1485 = vand.u32 %v50, 4294901760
  %1486 = vmatpush1.msra.mxu0 %v1485
  %1487 = vmatprep.subr.mxu0 0.0
  %v1488 = vand.u32 %v51, 4294901760
  %1489 = vmatpush1.msra.mxu0 %v1488
  %1490 = vmatprep.subr.mxu0 0.0
  %v1491 = vand.u32 %v52, 4294901760
  %1492 = vmatpush1.msra.mxu0 %v1491
  %1493 = vmatprep.subr.mxu0 0.0
  %v1494 = vand.u32 %v53, 4294901760
  %1495 = vmatpush1.msra.mxu0 %v1494
  %1496 = vmatprep.subr.mxu0 0.0
  %v1497 = vand.u32 %v54, 4294901760
  %1498 = vmatpush1.msra.mxu0 %v1497
  %1499 = vmatprep.subr.mxu0 0.0
  %v1500 = vand.u32 %v55, 4294901760
  %1501 = vmatpush1.msra.mxu0 %v1500
  %1502 = vmatprep.subr.mxu0 0.0
  %v1503 = vand.u32 %v56, 4294901760
  %1504 = vmatpush1.msra.mxu0 %v1503
  %1505 = vmatprep.subr.mxu0 0.0
  %v1506 = vand.u32 %v57, 4294901760
  %1507 = vmatpush1.msra.mxu0 %v1506
  %1508 = vmatprep.subr.mxu0 0.0
  %v1509 = vand.u32 %v58, 4294901760
  %1510 = vmatpush1.msra.mxu0 %v1509
  %1511 = vmatprep.subr.mxu0 0.0
  %v1512 = vand.u32 %v59, 4294901760
  %1513 = vmatpush1.msra.mxu0 %v1512
  %1514 = vmatprep.subr.mxu0 0.0
  %v1515 = vand.u32 %v60, 4294901760
  %1516 = vmatpush1.msra.mxu0 %v1515
  %1517 = vmatprep.subr.mxu0 0.0
  %v1518 = vand.u32 %v61, 4294901760
  %1519 = vmatpush1.msra.mxu0 %v1518
  %1520 = vmatprep.subr.mxu0 0.0
  %v1521 = vand.u32 %v62, 4294901760
  %1522 = vmatpush1.msra.mxu0 %v1521
  %1523 = vmatprep.subr.mxu0 0.0
  %v1524 = vand.u32 %v63, 4294901760
  %1525 = vmatpush1.msra.mxu0 %v1524
  %1526 = vmatprep.subr.mxu0 0.0
  %v1527 = vand.u32 %v64, 4294901760
  %1528 = vmatpush1.msra.mxu0 %v1527
  %1529 = vmatprep.subr.mxu0 0.0
  %v1530 = vand.u32 %v65, 4294901760
  %1531 = vmatpush1.msra.mxu0 %v1530
  %1532 = vmatprep.subr.mxu0 0.0
  %1533 = vmatpush1.msra.mxu0 0.0
  %1534 = vmatprep.subr.mxu0 0.0
  %1535 = vmatpush1.msra.mxu0 0.0
  %1536 = vmatprep.subr.mxu0 0.0
  %1537 = vmatpush1.msra.mxu0 0.0
  %1538 = vmatprep.subr.mxu0 0.0
  %1539 = vmatpush1.msra.mxu0 0.0
  %1540 = vmatprep.subr.mxu0 0.0
  %1541 = vmatpush1.msra.mxu0 0.0
  %1542 = vmatprep.subr.mxu0 0.0
  %1543 = vmatpush1.msra.mxu0 0.0
  %1544 = vmatprep.subr.mxu0 0.0
  %1545 = vmatpush1.msra.mxu0 0.0
  %1546 = vmatprep.subr.mxu0 0.0
  %1547 = vmatpush1.msra.mxu0 0.0
  %1548 = vmatprep.subr.mxu0 0.0
  %1549 = vmatpush1.msra.mxu0 0.0
  %1550 = vmatprep.subr.mxu0 0.0
  %1551 = vmatpush1.msra.mxu0 0.0
  %1552 = vmatprep.subr.mxu0 0.0
  %1553 = vmatpush1.msra.mxu0 0.0
  %1554 = vmatprep.subr.mxu0 0.0
  %1555 = vmatpush1.msra.mxu0 0.0
  %1556 = vmatprep.subr.mxu0 0.0
  %1557 = vmatpush1.msra.mxu0 0.0
  %1558 = vmatprep.subr.mxu0 0.0
  %1559 = vmatpush1.msra.mxu0 0.0
  %1560 = vmatprep.subr.mxu0 0.0
  %1561 = vmatpush1.msra.mxu0 0.0
  %1562 = vmatprep.subr.mxu0 0.0
  %1563 = vmatpush1.msra.mxu0 0.0
  %1564 = vmatprep.mubr.f32.mxu0 0.0
  %v1565 = vand.u32 %v17, 4294901760
  %1566 = vmatmul.mubr.f32.gmra.mrb[0].mxu0 %v1565
  %v1567 = vpop.f32.mrb[0].mxu0
  %v1568 = vadd.f32 %v1481, %v1567
  %v1569 = vpop.f32.mrb[0].mxu0
  %1570 = vdwg.mxu0
  %v1571 = vmul.f32 %v1568, 0.01
  %v1572 = vmax.f32 %v1568, %v1571
  %vm1573 = vcmask 523264
  %1574 = vst.msk [vmem:[%s3] sm:$0xff] %vm1573, %v1572
  // Predicated region
  $region14: #{neuralnet_forward.1} parent=0 // pred_check
    _
  $region15: #{neuralnet_forward.1} parent=0 // pred_check_branch
    %1576 = sbr.rel (0) target = $region17
  $region16: #{neuralnet_forward.1} parent=0 // pred_region
    _
  $region17: #{neuralnet_forward.1} parent=0 // pred_fallthru
    _
  // Predicated region
  $region18: #{neuralnet_forward.1} parent=0 // pred_check
    _
  $region19: #{neuralnet_forward.1} parent=0 // pred_check_branch
    %1578 = sbr.rel (0) target = $region21
  $region20: #{neuralnet_forward.1} parent=0 // pred_region
    _
  $region21: #{neuralnet_forward.1} parent=0 // pred_fallthru
    _

</llo_original>
